<compile_context>
chip_gen: v7x
topology: tpu7x:2x2x1
jax: 0.10.0
libtpu: 0.0.40
codegen_flags: <defaults>
</compile_context>

<pallas_src>
import functools

import jax
import jax.numpy as jnp
from jax.experimental import pallas as pl
from jax.experimental.pallas import tpu as pltpu

EPS = 1e-5                                   # nn.BatchNorm1d default eps
D_IN = 784
H1, H2, H3, OUT_PAD = 256, 128, 128, 128     # 150/100/50/10 padded to lane multiples
TILE_B = 512                                 # batch tile (rows) for the grid


def _round_up(n, m):
    return (n + m - 1) // m * m


def mlp_kernel(x_ref, w1_ref, w2_ref, w3_ref, w4_ref, vecs_ref, o_ref,
               stats1_ref, stats2_ref, *, inv_b):
    """grid = (phase, batch_tile), iterated phase-major.

    vecs_ref rows: 0=gamma1, 1=beta1, 2=gamma2, 3=beta2, 4=b3, 5=b4 (zero-padded).
    Zero padding of weights / gamma / beta keeps padded feature columns exactly 0.
    """
    phase = pl.program_id(0)
    bi = pl.program_id(1)

    @pl.when(jnp.logical_and(phase == 0, bi == 0))
    def _init():
        stats1_ref[...] = jnp.zeros_like(stats1_ref)
        stats2_ref[...] = jnp.zeros_like(stats2_ref)

    # fc1 (bias exactly cancelled by BN mean subtraction): bf16 MXU, f32 acc.
    x = x_ref[...].astype(jnp.bfloat16)                                  # (T, 784)
    h1 = jnp.dot(x, w1_ref[...], preferred_element_type=jnp.float32)     # (T, H1)

    @pl.when(phase == 0)
    def _stats1():
        stats1_ref[0:1, :] += jnp.sum(h1, axis=0, keepdims=True)
        stats1_ref[1:2, :] += jnp.sum(h1 * h1, axis=0, keepdims=True)

    def bn1_relu_fc2(h1):
        # BN1 scale/shift from full-batch stats (tiny (1, H1) math, EUP rsqrt).
        mu = stats1_ref[0:1, :] * inv_b
        var = jnp.maximum(stats1_ref[1:2, :] * inv_b - mu * mu, 0.0)
        s = vecs_ref[0:1, :] * jax.lax.rsqrt(var + EPS)
        t = vecs_ref[1:2, :] - mu * s
        a = jnp.maximum(h1 * s + t, 0.0).astype(jnp.bfloat16)
        return jnp.dot(a, w2_ref[...], preferred_element_type=jnp.float32)  # (T, H2)

    @pl.when(phase == 1)
    def _stats2():
        h2 = bn1_relu_fc2(h1)
        stats2_ref[0:1, :] += jnp.sum(h2, axis=0, keepdims=True)
        stats2_ref[1:2, :] += jnp.sum(h2 * h2, axis=0, keepdims=True)

    @pl.when(phase == 2)
    def _finish():
        h2 = bn1_relu_fc2(h1)
        mu = stats2_ref[0:1, :] * inv_b
        var = jnp.maximum(stats2_ref[1:2, :] * inv_b - mu * mu, 0.0)
        s = vecs_ref[2:3, :H2] * jax.lax.rsqrt(var + EPS)
        t = vecs_ref[3:4, :H2] - mu * s
        a2 = jnp.maximum(h2 * s + t, 0.0).astype(jnp.bfloat16)
        h3 = (jnp.dot(a2, w3_ref[...], preferred_element_type=jnp.float32)
              + vecs_ref[4:5, :H3])
        a3 = jnp.maximum(h3, 0.0).astype(jnp.bfloat16)
        o_ref[...] = (jnp.dot(a3, w4_ref[...], preferred_element_type=jnp.float32)
                      + vecs_ref[5:6, :OUT_PAD]).astype(o_ref.dtype)


def init_params(key):
    """PyTorch-style init: U(-1/sqrt(fan_in), 1/sqrt(fan_in)).
    Weights stored as (in, out); biases / BN params as (1, out)."""
    dims = [(784, 150), (150, 100), (100, 50), (50, 10)]
    keys = jax.random.split(key, 2 * len(dims))
    params = []
    for i, (fin, fout) in enumerate(dims):
        bound = 1.0 / jnp.sqrt(jnp.float32(fin))
        w = jax.random.uniform(keys[2 * i], (fin, fout), jnp.float32, -bound, bound)
        b = jax.random.uniform(keys[2 * i + 1], (1, fout), jnp.float32, -bound, bound)
        params.append((w, b))
    g1 = jnp.ones((1, 150), jnp.float32)
    be1 = jnp.zeros((1, 150), jnp.float32)
    g2 = jnp.ones((1, 100), jnp.float32)
    be2 = jnp.zeros((1, 100), jnp.float32)
    (w1, b1), (w2, b2), (w3, b3), (w4, b4) = params
    return (w1, b1, g1, be1, w2, b2, g2, be2, w3, b3, w4, b4)


def prepare_params(params):
    """One-time, out-of-forward weight prep: bf16 cast + zero padding to lane
    multiples + packing of small per-feature vectors into one (6, H1) array."""
    (w1, b1, g1, be1, w2, b2, g2, be2, w3, b3, w4, b4) = params
    # b1/b2 are exactly cancelled by training-mode BatchNorm mean subtraction.
    del b1, b2

    def pad_w(w, rows, cols):
        return (jnp.zeros((rows, cols), jnp.float32)
                .at[:w.shape[0], :w.shape[1]].set(w).astype(jnp.bfloat16))

    def pad_v(v):
        return jnp.zeros((1, H1), jnp.float32).at[:, :v.shape[1]].set(v)

    w1p = pad_w(w1, D_IN, H1)
    w2p = pad_w(w2, H1, H2)
    w3p = pad_w(w3, H2, H3)
    w4p = pad_w(w4, H3, OUT_PAD)
    vecs = jnp.concatenate(
        [pad_v(g1), pad_v(be1), pad_v(g2), pad_v(be2), pad_v(b3), pad_v(b4)],
        axis=0)                                   # (6, H1) f32
    return (w1p, w2p, w3p, w4p, vecs)


@jax.jit
def mlp_forward(x, prepared):
    w1p, w2p, w3p, w4p, vecs = prepared

    x2 = x.reshape(-1, D_IN)                      # x.view(-1, 784)
    B = x2.shape[0]
    tile = min(TILE_B, _round_up(B, 8))
    bpad = _round_up(B, tile)
    if bpad != B:
        # Zero rows contribute 0 to both BN sums (no fc1/fc2 bias), so stats
        # stay exact when dividing by the true B below.
        x2 = jnp.pad(x2, ((0, bpad - B), (0, 0)))
    nb = bpad // tile

    kernel = functools.partial(mlp_kernel, inv_b=1.0 / B)
    out = pl.pallas_call(
        kernel,
        out_shape=jax.ShapeDtypeStruct((bpad, OUT_PAD), jnp.float32),
        grid=(3, nb),
        in_specs=[
            pl.BlockSpec((tile, D_IN), lambda p, b: (b, 0)),    # x: streamed
            pl.BlockSpec((D_IN, H1), lambda p, b: (0, 0)),      # weights stay
            pl.BlockSpec((H1, H2), lambda p, b: (0, 0)),        # VMEM-resident
            pl.BlockSpec((H2, H3), lambda p, b: (0, 0)),
            pl.BlockSpec((H3, OUT_PAD), lambda p, b: (0, 0)),
            pl.BlockSpec((6, H1), lambda p, b: (0, 0)),         # packed vectors
        ],
        # Output is only written in phase 2; park its block index at 0 before
        # that so phases 0/1 never write garbage tiles back to HBM.
        out_specs=pl.BlockSpec((tile, OUT_PAD),
                               lambda p, b: (jnp.where(p == 2, b, 0), 0)),
        scratch_shapes=[pltpu.VMEM((2, H1), jnp.float32),   # BN1 sum / sumsq
                        pltpu.VMEM((2, H2), jnp.float32)],  # BN2 sum / sumsq
        compiler_params=pltpu.CompilerParams(
            # Both axes must be sequential: the phase axis has a hard data
            # dependency, and the batch axis carries the BN-stat accumulators.
            # TODO(synk): on v7x, shard the batch axis across the 2 TensorCores
            # with a cross-core combine of the partial sums before phases 1/2.
            dimension_semantics=("arbitrary", "arbitrary"),
            vmem_limit_bytes=32 << 20),
    )(x2, w1p, w2p, w3p, w4p, vecs)
    return out[:B, :10]


if __name__ == "__main__":
    key = jax.random.PRNGKey(0)
    k_x, k_p = jax.random.split(key)
    # MNIST-like input: (B, 1, 28, 28); forward flattens to (B, 784)
    x = jax.random.normal(k_x, (8, 1, 28, 28), jnp.float32)
    params = init_params(k_p)
    prepared = prepare_params(params)      # one-time weight prep (hoisted)

    out = mlp_forward(x, prepared)
    jax.block_until_ready(out)
    assert out.shape == (8, 10) and out.dtype == jnp.float32
    print("KERNEL_OK")
</pallas_src>

<mosaic_0001>
module attributes {stable_mosaic.version = 11 : i64} {
  func.func @mlp_kernel(%arg0: i32, %arg1: i32, %arg2: memref<8x784xf32, #tpu.memory_space<vmem>>, %arg3: memref<784x256xbf16, #tpu.memory_space<vmem>>, %arg4: memref<256x128xbf16, #tpu.memory_space<vmem>>, %arg5: memref<128x128xbf16, #tpu.memory_space<vmem>>, %arg6: memref<128x128xbf16, #tpu.memory_space<vmem>>, %arg7: memref<6x256xf32, #tpu.memory_space<vmem>>, %arg8: memref<8x128xf32, #tpu.memory_space<vmem>>, %arg9: memref<2x256xf32, #tpu.memory_space<vmem>>, %arg10: memref<2x128xf32, #tpu.memory_space<vmem>>) attributes {dimension_semantics = [#tpu.dimension_semantics<arbitrary>, #tpu.dimension_semantics<arbitrary>], iteration_bounds = array<i64: 3, 1>, scalar_prefetch = 0 : i64, scratch_operands = 2 : i64, tpu.core_type = #tpu.core_type<tc>, window_params = [{transform_indices = @transform_0, window_bounds = array<i64: 8, 784>}, {pipeline_mode = #tpu.pipeline_mode<synchronous>, transform_indices = @transform_1, window_bounds = array<i64: 784, 256>}, {pipeline_mode = #tpu.pipeline_mode<synchronous>, transform_indices = @transform_2, window_bounds = array<i64: 256, 128>}, {pipeline_mode = #tpu.pipeline_mode<synchronous>, transform_indices = @transform_3, window_bounds = array<i64: 128, 128>}, {pipeline_mode = #tpu.pipeline_mode<synchronous>, transform_indices = @transform_4, window_bounds = array<i64: 128, 128>}, {pipeline_mode = #tpu.pipeline_mode<synchronous>, transform_indices = @transform_5, window_bounds = array<i64: 6, 256>}, {transform_indices = @transform_6, window_bounds = array<i64: 8, 128>}]} {
    %c0_i32 = arith.constant 0 : i32
    %0 = arith.cmpi eq, %arg0, %c0_i32 : i32
    %c0_i32_0 = arith.constant 0 : i32
    %1 = arith.cmpi eq, %arg1, %c0_i32_0 : i32
    %2 = arith.andi %0, %1 : i1
    %3 = arith.extui %2 : i1 to i32
    %c0_i32_1 = arith.constant 0 : i32
    %4 = arith.cmpi ne, %3, %c0_i32_1 : i32
    scf.if %4 {
      %cst_9 = arith.constant 0.000000e+00 : f32
      %18 = vector.broadcast %cst_9 : f32 to vector<2x256xf32>
      %c0_10 = arith.constant 0 : index
      %c0_11 = arith.constant 0 : index
      %19 = vector.load %arg9[%c0_10, %c0_11] : memref<2x256xf32, #tpu.memory_space<vmem>>, vector<2x256xf32>
      tpu.vector_store %arg9[%c0_10, %c0_11], %18 {strides = array<i32>} : memref<2x256xf32, #tpu.memory_space<vmem>>, vector<2x256xf32>,
      %cst_12 = arith.constant 0.000000e+00 : f32
      %20 = vector.broadcast %cst_12 : f32 to vector<2x128xf32>
      %c0_13 = arith.constant 0 : index
      %c0_14 = arith.constant 0 : index
      %21 = vector.load %arg10[%c0_13, %c0_14] : memref<2x128xf32, #tpu.memory_space<vmem>>, vector<2x128xf32>
      tpu.vector_store %arg10[%c0_13, %c0_14], %20 {strides = array<i32>} : memref<2x128xf32, #tpu.memory_space<vmem>>, vector<2x128xf32>,
    } else {
    }
    %c0 = arith.constant 0 : index
    %c0_2 = arith.constant 0 : index
    %5 = vector.load %arg2[%c0, %c0_2] : memref<8x784xf32, #tpu.memory_space<vmem>>, vector<8x784xf32>
    %6 = arith.truncf %5 : vector<8x784xf32> to vector<8x784xbf16>
    %c0_3 = arith.constant 0 : index
    %c0_4 = arith.constant 0 : index
    %7 = vector.load %arg3[%c0_3, %c0_4] : memref<784x256xbf16, #tpu.memory_space<vmem>>, vector<784x256xbf16>
    %cst = arith.constant dense<0.000000e+00> : vector<8x256xf32>
    %8 = tpu.matmul %6, %7, %cst {dimension_numbers = #tpu.dot_dimension_numbers<[1], [0], [0], [1], [0, 0, 1, 1], [], []>} : vector<8x784xbf16>, vector<784x256xbf16>, vector<8x256xf32> -> vector<8x256xf32>
    %c0_i32_5 = arith.constant 0 : i32
    %9 = arith.cmpi eq, %arg0, %c0_i32_5 : i32
    %10 = arith.extui %9 : i1 to i32
    %c0_i32_6 = arith.constant 0 : i32
    %11 = arith.cmpi ne, %10, %c0_i32_6 : i32
    scf.if %11 {
      %c0_9 = arith.constant 0 : index
      %c0_10 = arith.constant 0 : index
      %18 = vector.load %arg9[%c0_9, %c0_10] : memref<2x256xf32, #tpu.memory_space<vmem>>, vector<1x256xf32>
      %cst_11 = arith.constant dense<0.000000e+00> : vector<256xf32>
      %19 = vector.multi_reduction <add>, %8, %cst_11 [0] : vector<8x256xf32> to vector<256xf32>
      %20 = vector.shape_cast %19 : vector<256xf32> to vector<1x256xf32>
      %21 = arith.addf %18, %20 : vector<1x256xf32>
      %c0_12 = arith.constant 0 : index
      %c0_13 = arith.constant 0 : index
      %22 = vector.load %arg9[%c0_12, %c0_13] : memref<2x256xf32, #tpu.memory_space<vmem>>, vector<1x256xf32>
      tpu.vector_store %arg9[%c0_12, %c0_13], %21 {strides = array<i32>} : memref<2x256xf32, #tpu.memory_space<vmem>>, vector<1x256xf32>,
      %c1 = arith.constant 1 : index
      %c0_14 = arith.constant 0 : index
      %23 = vector.load %arg9[%c1, %c0_14] : memref<2x256xf32, #tpu.memory_space<vmem>>, vector<1x256xf32>
      %24 = arith.mulf %8, %8 : vector<8x256xf32>
      %cst_15 = arith.constant dense<0.000000e+00> : vector<256xf32>
      %25 = vector.multi_reduction <add>, %24, %cst_15 [0] : vector<8x256xf32> to vector<256xf32>
      %26 = vector.shape_cast %25 : vector<256xf32> to vector<1x256xf32>
      %27 = arith.addf %23, %26 : vector<1x256xf32>
      %c1_16 = arith.constant 1 : index
      %c0_17 = arith.constant 0 : index
      %28 = vector.load %arg9[%c1_16, %c0_17] : memref<2x256xf32, #tpu.memory_space<vmem>>, vector<1x256xf32>
      tpu.vector_store %arg9[%c1_16, %c0_17], %27 {strides = array<i32>} : memref<2x256xf32, #tpu.memory_space<vmem>>, vector<1x256xf32>,
    } else {
    }
    %c1_i32 = arith.constant 1 : i32
    %12 = arith.cmpi eq, %arg0, %c1_i32 : i32
    %13 = arith.extui %12 : i1 to i32
    %c0_i32_7 = arith.constant 0 : i32
    %14 = arith.cmpi ne, %13, %c0_i32_7 : i32
    scf.if %14 {
      %c0_9 = arith.constant 0 : index
      %c0_10 = arith.constant 0 : index
      %18 = vector.load %arg9[%c0_9, %c0_10] : memref<2x256xf32, #tpu.memory_space<vmem>>, vector<1x256xf32>
      %cst_11 = arith.constant 1.250000e-01 : f32
      %19 = vector.broadcast %cst_11 : f32 to vector<1x256xf32>
      %20 = arith.mulf %18, %19 : vector<1x256xf32>
      %c1 = arith.constant 1 : index
      %c0_12 = arith.constant 0 : index
      %21 = vector.load %arg9[%c1, %c0_12] : memref<2x256xf32, #tpu.memory_space<vmem>>, vector<1x256xf32>
      %cst_13 = arith.constant 1.250000e-01 : f32
      %22 = vector.broadcast %cst_13 : f32 to vector<1x256xf32>
      %23 = arith.mulf %21, %22 : vector<1x256xf32>
      %24 = arith.mulf %20, %20 : vector<1x256xf32>
      %25 = arith.subf %23, %24 : vector<1x256xf32>
      %cst_14 = arith.constant 0.000000e+00 : f32
      %26 = vector.broadcast %cst_14 : f32 to vector<1x256xf32>
      %27 = arith.maximumf %25, %26 : vector<1x256xf32>
      %c0_15 = arith.constant 0 : index
      %c0_16 = arith.constant 0 : index
      %28 = vector.load %arg7[%c0_15, %c0_16] : memref<6x256xf32, #tpu.memory_space<vmem>>, vector<1x256xf32>
      %cst_17 = arith.constant 9.99999974E-6 : f32
      %29 = vector.broadcast %cst_17 : f32 to vector<1x256xf32>
      %30 = arith.addf %27, %29 : vector<1x256xf32>
      %31 = math.rsqrt %30 : vector<1x256xf32>
      %32 = arith.mulf %28, %31 : vector<1x256xf32>
      %c1_18 = arith.constant 1 : index
      %c0_19 = arith.constant 0 : index
      %33 = vector.load %arg7[%c1_18, %c0_19] : memref<6x256xf32, #tpu.memory_space<vmem>>, vector<1x256xf32>
      %34 = arith.mulf %20, %32 : vector<1x256xf32>
      %35 = arith.subf %33, %34 : vector<1x256xf32>
      %36 = vector.broadcast %32 : vector<1x256xf32> to vector<8x256xf32>
      %37 = arith.mulf %8, %36 : vector<8x256xf32>
      %38 = vector.broadcast %35 : vector<1x256xf32> to vector<8x256xf32>
      %39 = arith.addf %37, %38 : vector<8x256xf32>
      %cst_20 = arith.constant 0.000000e+00 : f32
      %40 = vector.broadcast %cst_20 : f32 to vector<8x256xf32>
      %41 = arith.maximumf %39, %40 : vector<8x256xf32>
      %42 = arith.truncf %41 : vector<8x256xf32> to vector<8x256xbf16>
      %c0_21 = arith.constant 0 : index
      %c0_22 = arith.constant 0 : index
      %43 = vector.load %arg4[%c0_21, %c0_22] : memref<256x128xbf16, #tpu.memory_space<vmem>>, vector<256x128xbf16>
      %cst_23 = arith.constant dense<0.000000e+00> : vector<8x128xf32>
      %44 = tpu.matmul %42, %43, %cst_23 {dimension_numbers = #tpu.dot_dimension_numbers<[1], [0], [0], [1], [0, 0, 1, 1], [], []>} : vector<8x256xbf16>, vector<256x128xbf16>, vector<8x128xf32> -> vector<8x128xf32>
      %c0_24 = arith.constant 0 : index
      %c0_25 = arith.constant 0 : index
      %45 = vector.load %arg10[%c0_24, %c0_25] : memref<2x128xf32, #tpu.memory_space<vmem>>, vector<1x128xf32>
      %cst_26 = arith.constant dense<0.000000e+00> : vector<128xf32>
      %46 = vector.multi_reduction <add>, %44, %cst_26 [0] : vector<8x128xf32> to vector<128xf32>
      %47 = vector.shape_cast %46 : vector<128xf32> to vector<1x128xf32>
      %48 = arith.addf %45, %47 : vector<1x128xf32>
      %c0_27 = arith.constant 0 : index
      %c0_28 = arith.constant 0 : index
      %49 = vector.load %arg10[%c0_27, %c0_28] : memref<2x128xf32, #tpu.memory_space<vmem>>, vector<1x128xf32>
      tpu.vector_store %arg10[%c0_27, %c0_28], %48 {strides = array<i32>} : memref<2x128xf32, #tpu.memory_space<vmem>>, vector<1x128xf32>,
      %c1_29 = arith.constant 1 : index
      %c0_30 = arith.constant 0 : index
      %50 = vector.load %arg10[%c1_29, %c0_30] : memref<2x128xf32, #tpu.memory_space<vmem>>, vector<1x128xf32>
      %51 = arith.mulf %44, %44 : vector<8x128xf32>
      %cst_31 = arith.constant dense<0.000000e+00> : vector<128xf32>
      %52 = vector.multi_reduction <add>, %51, %cst_31 [0] : vector<8x128xf32> to vector<128xf32>
      %53 = vector.shape_cast %52 : vector<128xf32> to vector<1x128xf32>
      %54 = arith.addf %50, %53 : vector<1x128xf32>
      %c1_32 = arith.constant 1 : index
      %c0_33 = arith.constant 0 : index
      %55 = vector.load %arg10[%c1_32, %c0_33] : memref<2x128xf32, #tpu.memory_space<vmem>>, vector<1x128xf32>
      tpu.vector_store %arg10[%c1_32, %c0_33], %54 {strides = array<i32>} : memref<2x128xf32, #tpu.memory_space<vmem>>, vector<1x128xf32>,
    } else {
    }
    %c2_i32 = arith.constant 2 : i32
    %15 = arith.cmpi eq, %arg0, %c2_i32 : i32
    %16 = arith.extui %15 : i1 to i32
    %c0_i32_8 = arith.constant 0 : i32
    %17 = arith.cmpi ne, %16, %c0_i32_8 : i32
    scf.if %17 {
      %c0_9 = arith.constant 0 : index
      %c0_10 = arith.constant 0 : index
      %18 = vector.load %arg9[%c0_9, %c0_10] : memref<2x256xf32, #tpu.memory_space<vmem>>, vector<1x256xf32>
      %cst_11 = arith.constant 1.250000e-01 : f32
      %19 = vector.broadcast %cst_11 : f32 to vector<1x256xf32>
      %20 = arith.mulf %18, %19 : vector<1x256xf32>
      %c1 = arith.constant 1 : index
      %c0_12 = arith.constant 0 : index
      %21 = vector.load %arg9[%c1, %c0_12] : memref<2x256xf32, #tpu.memory_space<vmem>>, vector<1x256xf32>
      %cst_13 = arith.constant 1.250000e-01 : f32
      %22 = vector.broadcast %cst_13 : f32 to vector<1x256xf32>
      %23 = arith.mulf %21, %22 : vector<1x256xf32>
      %24 = arith.mulf %20, %20 : vector<1x256xf32>
      %25 = arith.subf %23, %24 : vector<1x256xf32>
      %cst_14 = arith.constant 0.000000e+00 : f32
      %26 = vector.broadcast %cst_14 : f32 to vector<1x256xf32>
      %27 = arith.maximumf %25, %26 : vector<1x256xf32>
      %c0_15 = arith.constant 0 : index
      %c0_16 = arith.constant 0 : index
      %28 = vector.load %arg7[%c0_15, %c0_16] : memref<6x256xf32, #tpu.memory_space<vmem>>, vector<1x256xf32>
      %cst_17 = arith.constant 9.99999974E-6 : f32
      %29 = vector.broadcast %cst_17 : f32 to vector<1x256xf32>
      %30 = arith.addf %27, %29 : vector<1x256xf32>
      %31 = math.rsqrt %30 : vector<1x256xf32>
      %32 = arith.mulf %28, %31 : vector<1x256xf32>
      %c1_18 = arith.constant 1 : index
      %c0_19 = arith.constant 0 : index
      %33 = vector.load %arg7[%c1_18, %c0_19] : memref<6x256xf32, #tpu.memory_space<vmem>>, vector<1x256xf32>
      %34 = arith.mulf %20, %32 : vector<1x256xf32>
      %35 = arith.subf %33, %34 : vector<1x256xf32>
      %36 = vector.broadcast %32 : vector<1x256xf32> to vector<8x256xf32>
      %37 = arith.mulf %8, %36 : vector<8x256xf32>
      %38 = vector.broadcast %35 : vector<1x256xf32> to vector<8x256xf32>
      %39 = arith.addf %37, %38 : vector<8x256xf32>
      %cst_20 = arith.constant 0.000000e+00 : f32
      %40 = vector.broadcast %cst_20 : f32 to vector<8x256xf32>
      %41 = arith.maximumf %39, %40 : vector<8x256xf32>
      %42 = arith.truncf %41 : vector<8x256xf32> to vector<8x256xbf16>
      %c0_21 = arith.constant 0 : index
      %c0_22 = arith.constant 0 : index
      %43 = vector.load %arg4[%c0_21, %c0_22] : memref<256x128xbf16, #tpu.memory_space<vmem>>, vector<256x128xbf16>
      %cst_23 = arith.constant dense<0.000000e+00> : vector<8x128xf32>
      %44 = tpu.matmul %42, %43, %cst_23 {dimension_numbers = #tpu.dot_dimension_numbers<[1], [0], [0], [1], [0, 0, 1, 1], [], []>} : vector<8x256xbf16>, vector<256x128xbf16>, vector<8x128xf32> -> vector<8x128xf32>
      %c0_24 = arith.constant 0 : index
      %c0_25 = arith.constant 0 : index
      %45 = vector.load %arg10[%c0_24, %c0_25] : memref<2x128xf32, #tpu.memory_space<vmem>>, vector<1x128xf32>
      %cst_26 = arith.constant 1.250000e-01 : f32
      %46 = vector.broadcast %cst_26 : f32 to vector<1x128xf32>
      %47 = arith.mulf %45, %46 : vector<1x128xf32>
      %c1_27 = arith.constant 1 : index
      %c0_28 = arith.constant 0 : index
      %48 = vector.load %arg10[%c1_27, %c0_28] : memref<2x128xf32, #tpu.memory_space<vmem>>, vector<1x128xf32>
      %cst_29 = arith.constant 1.250000e-01 : f32
      %49 = vector.broadcast %cst_29 : f32 to vector<1x128xf32>
      %50 = arith.mulf %48, %49 : vector<1x128xf32>
      %51 = arith.mulf %47, %47 : vector<1x128xf32>
      %52 = arith.subf %50, %51 : vector<1x128xf32>
      %cst_30 = arith.constant 0.000000e+00 : f32
      %53 = vector.broadcast %cst_30 : f32 to vector<1x128xf32>
      %54 = arith.maximumf %52, %53 : vector<1x128xf32>
      %c2 = arith.constant 2 : index
      %c0_31 = arith.constant 0 : index
      %55 = vector.load %arg7[%c2, %c0_31] : memref<6x256xf32, #tpu.memory_space<vmem>>, vector<1x128xf32>
      %cst_32 = arith.constant 9.99999974E-6 : f32
      %56 = vector.broadcast %cst_32 : f32 to vector<1x128xf32>
      %57 = arith.addf %54, %56 : vector<1x128xf32>
      %58 = math.rsqrt %57 : vector<1x128xf32>
      %59 = arith.mulf %55, %58 : vector<1x128xf32>
      %c3 = arith.constant 3 : index
      %c0_33 = arith.constant 0 : index
      %60 = vector.load %arg7[%c3, %c0_33] : memref<6x256xf32, #tpu.memory_space<vmem>>, vector<1x128xf32>
      %61 = arith.mulf %47, %59 : vector<1x128xf32>
      %62 = arith.subf %60, %61 : vector<1x128xf32>
      %63 = vector.broadcast %59 : vector<1x128xf32> to vector<8x128xf32>
      %64 = arith.mulf %44, %63 : vector<8x128xf32>
      %65 = vector.broadcast %62 : vector<1x128xf32> to vector<8x128xf32>
      %66 = arith.addf %64, %65 : vector<8x128xf32>
      %cst_34 = arith.constant 0.000000e+00 : f32
      %67 = vector.broadcast %cst_34 : f32 to vector<8x128xf32>
      %68 = arith.maximumf %66, %67 : vector<8x128xf32>
      %69 = arith.truncf %68 : vector<8x128xf32> to vector<8x128xbf16>
      %c0_35 = arith.constant 0 : index
      %c0_36 = arith.constant 0 : index
      %70 = vector.load %arg5[%c0_35, %c0_36] : memref<128x128xbf16, #tpu.memory_space<vmem>>, vector<128x128xbf16>
      %cst_37 = arith.constant dense<0.000000e+00> : vector<8x128xf32>
      %71 = tpu.matmul %69, %70, %cst_37 {dimension_numbers = #tpu.dot_dimension_numbers<[1], [0], [0], [1], [0, 0, 1, 1], [], []>} : vector<8x128xbf16>, vector<128x128xbf16>, vector<8x128xf32> -> vector<8x128xf32>
      %c4 = arith.constant 4 : index
      %c0_38 = arith.constant 0 : index
      %72 = vector.load %arg7[%c4, %c0_38] : memref<6x256xf32, #tpu.memory_space<vmem>>, vector<1x128xf32>
      %73 = vector.broadcast %72 : vector<1x128xf32> to vector<8x128xf32>
      %74 = arith.addf %71, %73 : vector<8x128xf32>
      %cst_39 = arith.constant 0.000000e+00 : f32
      %75 = vector.broadcast %cst_39 : f32 to vector<8x128xf32>
      %76 = arith.maximumf %74, %75 : vector<8x128xf32>
      %77 = arith.truncf %76 : vector<8x128xf32> to vector<8x128xbf16>
      %c0_40 = arith.constant 0 : index
      %c0_41 = arith.constant 0 : index
      %78 = vector.load %arg6[%c0_40, %c0_41] : memref<128x128xbf16, #tpu.memory_space<vmem>>, vector<128x128xbf16>
      %cst_42 = arith.constant dense<0.000000e+00> : vector<8x128xf32>
      %79 = tpu.matmul %77, %78, %cst_42 {dimension_numbers = #tpu.dot_dimension_numbers<[1], [0], [0], [1], [0, 0, 1, 1], [], []>} : vector<8x128xbf16>, vector<128x128xbf16>, vector<8x128xf32> -> vector<8x128xf32>
      %c5 = arith.constant 5 : index
      %c0_43 = arith.constant 0 : index
      %80 = vector.load %arg7[%c5, %c0_43] : memref<6x256xf32, #tpu.memory_space<vmem>>, vector<1x128xf32>
      %81 = vector.broadcast %80 : vector<1x128xf32> to vector<8x128xf32>
      %82 = arith.addf %79, %81 : vector<8x128xf32>
      %c0_44 = arith.constant 0 : index
      %c0_45 = arith.constant 0 : index
      %83 = vector.load %arg8[%c0_44, %c0_45] : memref<8x128xf32, #tpu.memory_space<vmem>>, vector<8x128xf32>
      tpu.vector_store %arg8[%c0_44, %c0_45], %82 {strides = array<i32>} : memref<8x128xf32, #tpu.memory_space<vmem>>, vector<8x128xf32>,
    } else {
    }
    return
  }
  func.func @transform_0(%arg0: i32, %arg1: i32) -> (i32, i32) {
    %c0_i32 = arith.constant 0 : i32
    %c0_i32_0 = arith.constant 0 : i32
    return %arg1, %c0_i32 : i32, i32
  }
  func.func @transform_1(%arg0: i32, %arg1: i32) -> (i32, i32) {
    %c0_i32 = arith.constant 0 : i32
    %c0_i32_0 = arith.constant 0 : i32
    %c0_i32_1 = arith.constant 0 : i32
    return %c0_i32, %c0_i32_0 : i32, i32
  }
  func.func @transform_2(%arg0: i32, %arg1: i32) -> (i32, i32) {
    %c0_i32 = arith.constant 0 : i32
    %c0_i32_0 = arith.constant 0 : i32
    %c0_i32_1 = arith.constant 0 : i32
    return %c0_i32, %c0_i32_0 : i32, i32
  }
  func.func @transform_3(%arg0: i32, %arg1: i32) -> (i32, i32) {
    %c0_i32 = arith.constant 0 : i32
    %c0_i32_0 = arith.constant 0 : i32
    %c0_i32_1 = arith.constant 0 : i32
    return %c0_i32, %c0_i32_0 : i32, i32
  }
  func.func @transform_4(%arg0: i32, %arg1: i32) -> (i32, i32) {
    %c0_i32 = arith.constant 0 : i32
    %c0_i32_0 = arith.constant 0 : i32
    %c0_i32_1 = arith.constant 0 : i32
    return %c0_i32, %c0_i32_0 : i32, i32
  }
  func.func @transform_5(%arg0: i32, %arg1: i32) -> (i32, i32) {
    %c0_i32 = arith.constant 0 : i32
    %c0_i32_0 = arith.constant 0 : i32
    %c0_i32_1 = arith.constant 0 : i32
    return %c0_i32, %c0_i32_0 : i32, i32
  }
  func.func @transform_6(%arg0: i32, %arg1: i32) -> (i32, i32) {
    %c2_i32 = arith.constant 2 : i32
    %0 = arith.cmpi eq, %arg0, %c2_i32 : i32
    %c0_i32 = arith.constant 0 : i32
    %1 = arith.select %0, %arg1, %c0_i32 : i32
    %c0_i32_0 = arith.constant 0 : i32
    %c0_i32_1 = arith.constant 0 : i32
    return %1, %c0_i32_0 : i32, i32
  }
}

</mosaic_0001>

<llo_original>
// kernel: mlp_forward.1
$region0: #{mlp_forward.1}
  #allocation0 [shape = 'u32[]', space=smem, size = 0x4, offset = 0x4, fixed_abs, tag = 'smem constant byte address 0x4 - core index']
  #allocation1 [shape = 'u32[144,128]{1,0:T(1,128)}', space=vmem, size = 0x12000, scoped, tag = 'internal scratch']
  #allocation2 [shape = 'f32[2,256]{1,0:T(2,128)}', space=vmem, size = 0x800, scoped, tag = 'scratch operand']
  #allocation3 [shape = 'f32[2,128]{1,0:T(2,128)}', space=vmem, size = 0x400, scoped, tag = 'scratch operand']
  %s0 = inlined_call_operand.vmem [shape: f32[8,784], index: 0, kind: input, shape index: {}]
  %s1 = inlined_call_operand.vmem [shape: bf16[784,256], index: 1, kind: input, shape index: {}]
  %s2 = inlined_call_operand.hbm [shape: bf16[256,128], index: 2, kind: input, shape index: {}]
  %s3 = inlined_call_operand.hbm [shape: bf16[128,128], index: 3, kind: input, shape index: {}]
  %s4 = inlined_call_operand.hbm [shape: bf16[128,128], index: 4, kind: input, shape index: {}]
  %s5 = inlined_call_operand.vmem [shape: f32[6,256], index: 5, kind: input, shape index: {}]
  %s6 = inlined_call_operand.hbm [shape: f32[8,128], index: 6, kind: output, shape index: {}]
  %s7 = sld [smem:[#allocation0]]
  $region85: #{mlp_forward.1} parent=0
    _
  %s9 = ssub.s32 1, %s7
  %s10 = scalar_select 0, %s9, %s7
  $region1: #{mlp_forward.1} parent=0
    #allocation4 [shape = 'u8[65536]{0}', space=vmem, size = 0x10000, scoped, tag = 'input window, operand 2, single buffered']
    #allocation5 [shape = 's32[2]{0}', space=sflag, size = 0x8, scoped, tag = 'scoped memory for mlp_forward.1']
    #allocation6 [shape = 's32[2]{0}', space=sflag, size = 0x8, scoped, tag = 'scoped memory for mlp_forward.1']
    #allocation7 [shape = 'u8[32768]{0}', space=vmem, size = 0x8000, scoped, tag = 'input window, operand 3, single buffered']
    #allocation8 [shape = 's32[1]{0}', space=sflag, size = 0x4, scoped, tag = 'scoped memory for mlp_forward.1']
    #allocation9 [shape = 'u8[32768]{0}', space=vmem, size = 0x8000, scoped, tag = 'input window, operand 4, single buffered']
    #allocation10 [shape = 'u8[8192]{0}', space=vmem, size = 0x2000, scoped, tag = 'output window, operand 0']
    %11 = vsyncpa [#allocation5], 0
    %12 = vsyncpa [#allocation8], 0
    %13 = vsyncpa [#allocation6], 0
    %s14 = scalar_lea.sflag [#allocation6], 1
    %15 = vsyncpa %s14, 0
    loop: start=0, step=1, limit=5
    $region2: #{mlp_forward.1} parent=1 // loop_pre_header
      _
    $region3: #{mlp_forward.1} parent=1 // loop_header
      %s17 = sphi 0, %s21
      %p18 = scmp.ge.s32.totalorder %s17, 5
      %s24 = sphi 0, %s36
      %s25 = sphi 0, %s32
      %s26 = sphi 0, %s24
      %s27 = sphi 0, %s25
      %s28 = sphi 0, %s26
      %s29 = sphi 0, %s27
      %s39 = sphi 0, %s41
      %s42 = sphi 0, %s39
      %s43 = sphi 0, %s42
      %s59 = sphi 0, %s43
      %s63 = sphi 0, %s63
      %s65 = sphi 0, %s63
      %s66 = sphi 0, %s65
      %s80 = sphi 0, %s66
      %s84 = sphi 0, %s84
      %s86 = sphi 0, %s84
      %s87 = sphi 0, %s86
      %s101 = sphi 0, %s87
      %s105 = sphi 0, %s105
      %s107 = sphi 0, %s105
      %s108 = sphi 0, %s107
      %s122 = sphi 0, %s108
      %s126 = sphi 0, %s126
      %s128 = sphi 0, %s126
      %s129 = sphi 0, %s128
      %s143 = sphi 0, %s129
      %s147 = sphi 0, %s147
      %s149 = sphi 0, %s147
      %s150 = sphi 0, %s149
      %s164 = sphi 0, %s150
      %s174 = sphi 0, %s176
      %s177 = sphi 0, %s174
      %s178 = sphi 0, %s177
      %s194 = sphi 0, %s178
    $region4: #{mlp_forward.1} parent=1 // loop_header_branch
      %20 = sbr.rel (%p18) target = $region8
    $region5: #{mlp_forward.1} parent=1 // loop_body
      %s22 = ssub.s32 %s17, 1
      %s23 = ssub.s32 %s17, 2
      %s30 = sadd.s32 1, %s25
      %p31 = scmp.ge.s32.totalorder %s30, 1
      %s32 = scalar_select %p31, 0, %s30
      %s33 = sadd.s32 1, %s24
      %s34 = scalar_select %p31, %s33, %s24
      %p35 = scmp.ge.s32.totalorder %s34, 3
      %s36 = scalar_select %p35, 0, %s34
      %s37 = ssub.s32 %s25, %s32
      %p38 = scmp.eq.s32.totalorder %s37, 0
      %s40 = sadd.s32 %s39, 1
      %s41 = scalar_select %p38, %s39, %s40
      %p44 = pneg %p38
      %p45 = scmp.eq.s32.totalorder %s17, 2
      %p46 = por %p44, %p45
      %p47 = scmp.ne.s32.totalorder %s39, %s42
      %p48 = scmp.eq.s32.totalorder %s17, 0
      %p49 = por %p47, %p48
      %p50 = scmp.ne.s32.totalorder %s39, %s42
      %p51 = scmp.eq.s32.totalorder %s22, 2
      %p52 = por %p50, %p51
      %p53 = scmp.ne.s32.totalorder %s42, %s43
      %p54 = scmp.eq.s32.totalorder %s22, 0
      %p55 = por %p53, %p54
      %p56 = scmp.ne.s32.totalorder %s42, %s43
      %p57 = scmp.eq.s32.totalorder %s23, 2
      %p58 = por %p56, %p57
      %p60 = scmp.ne.s32.totalorder %s43, %s59
      %p61 = scmp.eq.s32.totalorder %s23, 0
      %p62 = por %p60, %p61
      %s64 = sadd.s32 %s63, 1
      %p67 = scmp.eq.s32.totalorder %s17, 2
      %p68 = scmp.ne.s32.totalorder %s63, %s65
      %p69 = scmp.eq.s32.totalorder %s17, 0
      %p70 = por %p68, %p69
      %p71 = scmp.ne.s32.totalorder %s63, %s65
      %p72 = scmp.eq.s32.totalorder %s22, 2
      %p73 = por %p71, %p72
      %p74 = scmp.ne.s32.totalorder %s65, %s66
      %p75 = scmp.eq.s32.totalorder %s22, 0
      %p76 = por %p74, %p75
      %p77 = scmp.ne.s32.totalorder %s65, %s66
      %p78 = scmp.eq.s32.totalorder %s23, 2
      %p79 = por %p77, %p78
      %p81 = scmp.ne.s32.totalorder %s66, %s80
      %p82 = scmp.eq.s32.totalorder %s23, 0
      %p83 = por %p81, %p82
      %s85 = sadd.s32 %s84, 1
      %p88 = scmp.eq.s32.totalorder %s17, 2
      %p89 = scmp.ne.s32.totalorder %s84, %s86
      %p90 = scmp.eq.s32.totalorder %s17, 0
      %p91 = por %p89, %p90
      %p92 = scmp.ne.s32.totalorder %s84, %s86
      %p93 = scmp.eq.s32.totalorder %s22, 2
      %p94 = por %p92, %p93
      %p95 = scmp.ne.s32.totalorder %s86, %s87
      %p96 = scmp.eq.s32.totalorder %s22, 0
      %p97 = por %p95, %p96
      %p98 = scmp.ne.s32.totalorder %s86, %s87
      %p99 = scmp.eq.s32.totalorder %s23, 2
      %p100 = por %p98, %p99
      %p102 = scmp.ne.s32.totalorder %s87, %s101
      %p103 = scmp.eq.s32.totalorder %s23, 0
      %p104 = por %p102, %p103
      %s106 = sadd.s32 %s105, 1
      %p109 = scmp.eq.s32.totalorder %s17, 2
      %p110 = scmp.ne.s32.totalorder %s105, %s107
      %p111 = scmp.eq.s32.totalorder %s17, 0
      %p112 = por %p110, %p111
      %p113 = scmp.ne.s32.totalorder %s105, %s107
      %p114 = scmp.eq.s32.totalorder %s22, 2
      %p115 = por %p113, %p114
      %p116 = scmp.ne.s32.totalorder %s107, %s108
      %p117 = scmp.eq.s32.totalorder %s22, 0
      %p118 = por %p116, %p117
      %p119 = scmp.ne.s32.totalorder %s107, %s108
      %p120 = scmp.eq.s32.totalorder %s23, 2
      %p121 = por %p119, %p120
      %p123 = scmp.ne.s32.totalorder %s108, %s122
      %p124 = scmp.eq.s32.totalorder %s23, 0
      %p125 = por %p123, %p124
      %s127 = sadd.s32 %s126, 1
      %p130 = scmp.eq.s32.totalorder %s17, 2
      %p131 = scmp.ne.s32.totalorder %s126, %s128
      %p132 = scmp.eq.s32.totalorder %s17, 0
      %p133 = por %p131, %p132
      %p134 = scmp.ne.s32.totalorder %s126, %s128
      %p135 = scmp.eq.s32.totalorder %s22, 2
      %p136 = por %p134, %p135
      %p137 = scmp.ne.s32.totalorder %s128, %s129
      %p138 = scmp.eq.s32.totalorder %s22, 0
      %p139 = por %p137, %p138
      %p140 = scmp.ne.s32.totalorder %s128, %s129
      %p141 = scmp.eq.s32.totalorder %s23, 2
      %p142 = por %p140, %p141
      %p144 = scmp.ne.s32.totalorder %s129, %s143
      %p145 = scmp.eq.s32.totalorder %s23, 0
      %p146 = por %p144, %p145
      %s148 = sadd.s32 %s147, 1
      %p151 = scmp.eq.s32.totalorder %s17, 2
      %p152 = scmp.ne.s32.totalorder %s147, %s149
      %p153 = scmp.eq.s32.totalorder %s17, 0
      %p154 = por %p152, %p153
      %p155 = scmp.ne.s32.totalorder %s147, %s149
      %p156 = scmp.eq.s32.totalorder %s22, 2
      %p157 = por %p155, %p156
      %p158 = scmp.ne.s32.totalorder %s149, %s150
      %p159 = scmp.eq.s32.totalorder %s22, 0
      %p160 = por %p158, %p159
      %p161 = scmp.ne.s32.totalorder %s149, %s150
      %p162 = scmp.eq.s32.totalorder %s23, 2
      %p163 = por %p161, %p162
      %p165 = scmp.ne.s32.totalorder %s150, %s164
      %p166 = scmp.eq.s32.totalorder %s23, 0
      %p167 = por %p165, %p166
      %p168 = scmp.eq.s32.totalorder %s24, 2
      %s169 = scalar_select %p168, %s25, 0
      %p170 = scmp.eq.s32.totalorder %s36, 2
      %s171 = scalar_select %p170, %s32, 0
      %s172 = ssub.s32 %s169, %s171
      %p173 = scmp.eq.s32.totalorder %s172, 0
      %s175 = sadd.s32 %s174, 1
      %s176 = scalar_select %p173, %s174, %s175
      %p179 = pneg %p173
      %p180 = scmp.eq.s32.totalorder %s17, 2
      %p181 = por %p179, %p180
      %p182 = scmp.ne.s32.totalorder %s174, %s177
      %p183 = scmp.eq.s32.totalorder %s17, 0
      %p184 = por %p182, %p183
      %p185 = scmp.ne.s32.totalorder %s174, %s177
      %p186 = scmp.eq.s32.totalorder %s22, 2
      %p187 = por %p185, %p186
      %p188 = scmp.ne.s32.totalorder %s177, %s178
      %p189 = scmp.eq.s32.totalorder %s22, 0
      %p190 = por %p188, %p189
      %p191 = scmp.ne.s32.totalorder %s177, %s178
      %p192 = scmp.eq.s32.totalorder %s23, 2
      %p193 = por %p191, %p192
      %p195 = scmp.ne.s32.totalorder %s178, %s194
      %p196 = scmp.eq.s32.totalorder %s23, 0
      %p197 = por %p195, %p196
      %p198 = scmp.le.s32.totalorder 1, %s17
      %p199 = scmp.lt.s32.totalorder %s17, 4
      %p200 = pnand %p198, %p199
      %p201 = pneg %p200
      // Predicated region
      $region9: #{mlp_forward.1} parent=5 // pred_check
        _
      $region10: #{mlp_forward.1} parent=5 // pred_check_branch
        %203 = sbr.rel (%p200) target = $region12
      $region11: #{mlp_forward.1} parent=5 // pred_region
        %s204 = ssub.s32 %s17, 1
        // Predicated region
        $region13: #{mlp_forward.1} parent=11 // pred_check
          %p205 = pneg %p55
        $region14: #{mlp_forward.1} parent=11 // pred_check_branch
          %207 = sbr.rel (%p205) target = $region16
        $region15: #{mlp_forward.1} parent=11 // pred_region
          %p208 = scmp.lt.s32.totalorder %s27, 0
          %s209 = scalar_select %p208, %s27, 0
          %s210 = smul.addr %s209, 7
          %s211 = smul.addr %s210, 8
          %s212 = scalar_lea.vmem %s0, %s211
        $region16: #{mlp_forward.1} parent=11 // pred_fallthru
          _
        // Predicated region
        $region17: #{mlp_forward.1} parent=11 // pred_check
          %p213 = pneg %p76
        $region18: #{mlp_forward.1} parent=11 // pred_check_branch
          %215 = sbr.rel (%p213) target = $region20
        $region19: #{mlp_forward.1} parent=11 // pred_region
          _
        $region20: #{mlp_forward.1} parent=11 // pred_fallthru
          _
        // Predicated region
        $region21: #{mlp_forward.1} parent=11 // pred_check
          %p216 = pneg %p97
        $region22: #{mlp_forward.1} parent=11 // pred_check_branch
          %218 = sbr.rel (%p216) target = $region24
        $region23: #{mlp_forward.1} parent=11 // pred_region
          %s220 = ssub.s32 2048, 2048
          %221 = vsyncadd [#allocation5], %s220
          %s222 = sshll.u32 [#allocation4], 4
          %s223 = int_to_ptr.vmem [resolvable:$true] %s222
          %228 = dma.hbm_to_vmem [thread:$0]  %s2, 2048, %s223, [#allocation5], 64, 64, 4
        $region24: #{mlp_forward.1} parent=11 // pred_fallthru
          _
        // Predicated region
        $region25: #{mlp_forward.1} parent=11 // pred_check
          %p229 = pneg %p118
        $region26: #{mlp_forward.1} parent=11 // pred_check_branch
          %231 = sbr.rel (%p229) target = $region28
        $region27: #{mlp_forward.1} parent=11 // pred_region
          %s233 = ssub.s32 1024, 1024
          %234 = vsyncadd [#allocation8], %s233
          %s235 = sshll.u32 [#allocation7], 4
          %s236 = int_to_ptr.vmem [resolvable:$true] %s235
          %241 = dma.hbm_to_vmem [thread:$0]  %s3, 1024, %s236, [#allocation8], 64, 64, 4
        $region28: #{mlp_forward.1} parent=11 // pred_fallthru
          _
        // Predicated region
        $region29: #{mlp_forward.1} parent=11 // pred_check
          %p242 = pneg %p139
        $region30: #{mlp_forward.1} parent=11 // pred_check_branch
          %244 = sbr.rel (%p242) target = $region32
        $region31: #{mlp_forward.1} parent=11 // pred_region
          %s246 = ssub.s32 1024, 1024
          %247 = vsyncadd [#allocation8], %s246
          %s248 = sshll.u32 [#allocation9], 4
          %s249 = int_to_ptr.vmem [resolvable:$true] %s248
          %254 = dma.hbm_to_vmem [thread:$0]  %s4, 1024, %s249, [#allocation8], 64, 64, 4
        $region32: #{mlp_forward.1} parent=11 // pred_fallthru
          _
        // Predicated region
        $region33: #{mlp_forward.1} parent=11 // pred_check
          %p255 = pneg %p160
        $region34: #{mlp_forward.1} parent=11 // pred_check_branch
          %257 = sbr.rel (%p255) target = $region36
        $region35: #{mlp_forward.1} parent=11 // pred_region
          _
        $region36: #{mlp_forward.1} parent=11 // pred_fallthru
          _
      $region12: #{mlp_forward.1} parent=5 // pred_fallthru
        _
      %p258 = scmp.lt.s32.totalorder %s17, 3
      // Predicated region
      $region37: #{mlp_forward.1} parent=5 // pred_check
        %p259 = pneg %p258
      $region38: #{mlp_forward.1} parent=5 // pred_check_branch
        %261 = sbr.rel (%p259) target = $region40
      $region39: #{mlp_forward.1} parent=5 // pred_region
        _
      $region40: #{mlp_forward.1} parent=5 // pred_fallthru
        _
      %p262 = scmp.le.s32.totalorder 1, %s17
      %p263 = scmp.lt.s32.totalorder %s17, 4
      %p264 = pnand %p262, %p263
      %p265 = pneg %p264
      // Predicated region
      $region41: #{mlp_forward.1} parent=5 // pred_check
        _
      $region42: #{mlp_forward.1} parent=5 // pred_check_branch
        %267 = sbr.rel (%p264) target = $region44
      $region43: #{mlp_forward.1} parent=5 // pred_region
        %s268 = ssub.s32 %s17, 1
        // Predicated region
        $region45: #{mlp_forward.1} parent=43 // pred_check
          %p269 = pneg %p97
        $region46: #{mlp_forward.1} parent=43 // pred_check_branch
          %271 = sbr.rel (%p269) target = $region48
        $region47: #{mlp_forward.1} parent=43 // pred_region
          %272 = dma.done [#allocation5], 2048
        $region48: #{mlp_forward.1} parent=43 // pred_fallthru
          _
        // Predicated region
        $region49: #{mlp_forward.1} parent=43 // pred_check
          %p273 = pneg %p118
        $region50: #{mlp_forward.1} parent=43 // pred_check_branch
          %275 = sbr.rel (%p273) target = $region52
        $region51: #{mlp_forward.1} parent=43 // pred_region
          %276 = dma.done [#allocation8], 1024
        $region52: #{mlp_forward.1} parent=43 // pred_fallthru
          _
        // Predicated region
        $region53: #{mlp_forward.1} parent=43 // pred_check
          %p277 = pneg %p139
        $region54: #{mlp_forward.1} parent=43 // pred_check_branch
          %279 = sbr.rel (%p277) target = $region56
        $region55: #{mlp_forward.1} parent=43 // pred_region
          %280 = dma.done [#allocation8], 1024
        $region56: #{mlp_forward.1} parent=43 // pred_fallthru
          _
        %p281 = scmp.lt.s32.totalorder %s27, 0
        %s282 = scalar_select %p281, %s27, 0
        %s283 = smul.addr %s282, 7
        %s284 = smul.addr %s283, 8
        %s285 = scalar_lea.vmem %s0, %s284
        %p286 = pneg %p55
        %p287 = pneg %p52
        %p288 = pneg %p76
        %p289 = pneg %p73
        %p290 = pneg %p97
        %p291 = pneg %p94
        %p292 = pneg %p118
        %p293 = pneg %p115
        %p294 = pneg %p139
        %p295 = pneg %p136
        %p296 = pneg %p160
        %p297 = pneg %p157
        %p298 = pneg %p190
        %p299 = pneg %p187
        %s300 = sand.u32 %s177, 1
        %s301 = scalar_lea.sflag [#allocation6], %s300
        %s302 = sand.u32 %s177, 1
        %s303 = smul.addr %s302, 8
        %s304 = scalar_lea.vmem [#allocation10], %s303
        %p305 = scmp.lt.s32.totalorder %s27, 0
        %s306 = scalar_select %p305, %s27, 0
        %s307 = smul.addr %s306, 7
        %s308 = smul.addr %s307, 8
        %s309 = scalar_lea.vmem %s0, %s308
        %p310 = scmp.eq.s32.totalorder %s26, 2
        %s311 = scalar_select %p310, %s27, 0
        %p313 = scmp.eq.s32.totalorder %s26, 0
        %p314 = scmp.eq.s32.totalorder %s27, 0
        %p315 = pnand %p313, %p314
        %p316 = pneg %p315
        // Predicated region
        $region57: #{mlp_forward.1} parent=43 // pred_check
          _
        $region58: #{mlp_forward.1} parent=43 // pred_check_branch
          %318 = sbr.rel (%p315) target = $region60
        $region59: #{mlp_forward.1} parent=43 // pred_region
          %319 = vst [vmem:[#allocation2] sm:$0xf] 0.0
          %320 = vst [vmem:[#allocation3] sm:$0x3] 0.0
        $region60: #{mlp_forward.1} parent=43 // pred_fallthru
          _
        %v321 = vld [vmem:[%s309] sm:$0xff]
        %v322 = vld [vmem:[%s309 + $0x8] sm:$0xff]
        %v323 = vld [vmem:[%s309 + $0x10] sm:$0xff]
        %v324 = vld [vmem:[%s309 + $0x18] sm:$0xff]
        %v325 = vld [vmem:[%s309 + $0x20] sm:$0xff]
        %v326 = vld [vmem:[%s309 + $0x28] sm:$0xff]
        %v327 = vld [vmem:[%s309 + $0x30] sm:$0xff]
        %v328 = vpack.c.bf16 %v321, %v321
        %v329 = vpack.c.bf16 %v322, %v322
        %v330 = vpack.c.bf16 %v323, %v323
        %v331 = vpack.c.bf16 %v324, %v324
        %v332 = vpack.c.bf16 %v325, %v325
        %v333 = vpack.c.bf16 %v326, %v326
        %v334 = vpack.c.bf16 %v327, %v327
        %v335 = vld [vmem:[%s1] sm:$0xff]
        %v336 = vld [vmem:[%s1 + $0x8] sm:$0xff]
        %v337 = vld [vmem:[%s1 + $0x10] sm:$0xff]
        %v338 = vld [vmem:[%s1 + $0x18] sm:$0xff]
        %v339 = vld [vmem:[%s1 + $0x20] sm:$0xff]
        %v340 = vld [vmem:[%s1 + $0x28] sm:$0xff]
        %v341 = vld [vmem:[%s1 + $0x30] sm:$0xff]
        %v342 = vld [vmem:[%s1 + $0x38] sm:$0xff]
        %v343 = vld [vmem:[%s1 + $0x40] sm:$0xff]
        %v344 = vld [vmem:[%s1 + $0x48] sm:$0xff]
        %v345 = vld [vmem:[%s1 + $0x50] sm:$0xff]
        %v346 = vld [vmem:[%s1 + $0x58] sm:$0xff]
        %v347 = vld [vmem:[%s1 + $0x60] sm:$0xff]
        %v348 = vld [vmem:[%s1 + $0x68] sm:$0xff]
        %v349 = vld [vmem:[%s1 + $0x70] sm:$0xff]
        %v350 = vld [vmem:[%s1 + $0x78] sm:$0xff]
        %v351 = vld [vmem:[%s1 + $0x80] sm:$0xff]
        %v352 = vld [vmem:[%s1 + $0x88] sm:$0xff]
        %v353 = vld [vmem:[%s1 + $0x90] sm:$0xff]
        %v354 = vld [vmem:[%s1 + $0x98] sm:$0xff]
        %v355 = vld [vmem:[%s1 + $0xa0] sm:$0xff]
        %v356 = vld [vmem:[%s1 + $0xa8] sm:$0xff]
        %v357 = vld [vmem:[%s1 + $0xb0] sm:$0xff]
        %v358 = vld [vmem:[%s1 + $0xb8] sm:$0xff]
        %v359 = vld [vmem:[%s1 + $0xc0] sm:$0xff]
        %v360 = vld [vmem:[%s1 + $0xc8] sm:$0xff]
        %v361 = vld [vmem:[%s1 + $0xd0] sm:$0xff]
        %v362 = vld [vmem:[%s1 + $0xd8] sm:$0xff]
        %v363 = vld [vmem:[%s1 + $0xe0] sm:$0xff]
        %v364 = vld [vmem:[%s1 + $0xe8] sm:$0xff]
        %v365 = vld [vmem:[%s1 + $0xf0] sm:$0xff]
        %v366 = vld [vmem:[%s1 + $0xf8] sm:$0xff]
        %v367 = vld [vmem:[%s1 + $0x100] sm:$0xff]
        %v368 = vld [vmem:[%s1 + $0x108] sm:$0xff]
        %v369 = vld [vmem:[%s1 + $0x110] sm:$0xff]
        %v370 = vld [vmem:[%s1 + $0x118] sm:$0xff]
        %v371 = vld [vmem:[%s1 + $0x120] sm:$0xff]
        %v372 = vld [vmem:[%s1 + $0x128] sm:$0xff]
        %v373 = vld [vmem:[%s1 + $0x130] sm:$0xff]
        %v374 = vld [vmem:[%s1 + $0x138] sm:$0xff]
        %v375 = vld [vmem:[%s1 + $0x140] sm:$0xff]
        %v376 = vld [vmem:[%s1 + $0x148] sm:$0xff]
        %v377 = vld [vmem:[%s1 + $0x150] sm:$0xff]
        %v378 = vld [vmem:[%s1 + $0x158] sm:$0xff]
        %v379 = vld [vmem:[%s1 + $0x160] sm:$0xff]
        %v380 = vld [vmem:[%s1 + $0x168] sm:$0xff]
        %v381 = vld [vmem:[%s1 + $0x170] sm:$0xff]
        %v382 = vld [vmem:[%s1 + $0x178] sm:$0xff]
        %v383 = vld [vmem:[%s1 + $0x180] sm:$0xff]
        %v384 = vld [vmem:[%s1 + $0x188] sm:$0xff]
        %v385 = vld [vmem:[%s1 + $0x190] sm:$0xff]
        %v386 = vld [vmem:[%s1 + $0x198] sm:$0xff]
        %v387 = vld [vmem:[%s1 + $0x1a0] sm:$0xff]
        %v388 = vld [vmem:[%s1 + $0x1a8] sm:$0xff]
        %v389 = vld [vmem:[%s1 + $0x1b0] sm:$0xff]
        %v390 = vld [vmem:[%s1 + $0x1b8] sm:$0xff]
        %v391 = vld [vmem:[%s1 + $0x1c0] sm:$0xff]
        %v392 = vld [vmem:[%s1 + $0x1c8] sm:$0xff]
        %v393 = vld [vmem:[%s1 + $0x1d0] sm:$0xff]
        %v394 = vld [vmem:[%s1 + $0x1d8] sm:$0xff]
        %v395 = vld [vmem:[%s1 + $0x1e0] sm:$0xff]
        %v396 = vld [vmem:[%s1 + $0x1e8] sm:$0xff]
        %v397 = vld [vmem:[%s1 + $0x1f0] sm:$0xff]
        %v398 = vld [vmem:[%s1 + $0x1f8] sm:$0xff]
        %v399 = vld [vmem:[%s1 + $0x200] sm:$0xff]
        %v400 = vld [vmem:[%s1 + $0x208] sm:$0xff]
        %v401 = vld [vmem:[%s1 + $0x210] sm:$0xff]
        %v402 = vld [vmem:[%s1 + $0x218] sm:$0xff]
        %v403 = vld [vmem:[%s1 + $0x220] sm:$0xff]
        %v404 = vld [vmem:[%s1 + $0x228] sm:$0xff]
        %v405 = vld [vmem:[%s1 + $0x230] sm:$0xff]
        %v406 = vld [vmem:[%s1 + $0x238] sm:$0xff]
        %v407 = vld [vmem:[%s1 + $0x240] sm:$0xff]
        %v408 = vld [vmem:[%s1 + $0x248] sm:$0xff]
        %v409 = vld [vmem:[%s1 + $0x250] sm:$0xff]
        %v410 = vld [vmem:[%s1 + $0x258] sm:$0xff]
        %v411 = vld [vmem:[%s1 + $0x260] sm:$0xff]
        %v412 = vld [vmem:[%s1 + $0x268] sm:$0xff]
        %v413 = vld [vmem:[%s1 + $0x270] sm:$0xff]
        %v414 = vld [vmem:[%s1 + $0x278] sm:$0xff]
        %v415 = vld [vmem:[%s1 + $0x280] sm:$0xff]
        %v416 = vld [vmem:[%s1 + $0x288] sm:$0xff]
        %v417 = vld [vmem:[%s1 + $0x290] sm:$0xff]
        %v418 = vld [vmem:[%s1 + $0x298] sm:$0xff]
        %v419 = vld [vmem:[%s1 + $0x2a0] sm:$0xff]
        %v420 = vld [vmem:[%s1 + $0x2a8] sm:$0xff]
        %v421 = vld [vmem:[%s1 + $0x2b0] sm:$0xff]
        %v422 = vld [vmem:[%s1 + $0x2b8] sm:$0xff]
        %v423 = vld [vmem:[%s1 + $0x2c0] sm:$0xff]
        %v424 = vld [vmem:[%s1 + $0x2c8] sm:$0xff]
        %v425 = vld [vmem:[%s1 + $0x2d0] sm:$0xff]
        %v426 = vld [vmem:[%s1 + $0x2d8] sm:$0xff]
        %v427 = vld [vmem:[%s1 + $0x2e0] sm:$0xff]
        %v428 = vld [vmem:[%s1 + $0x2e8] sm:$0xff]
        %v429 = vld [vmem:[%s1 + $0x2f0] sm:$0xff]
        %v430 = vld [vmem:[%s1 + $0x2f8] sm:$0xff]
        %v431 = vld [vmem:[%s1 + $0x300] sm:$0xff]
        %v432 = vld [vmem:[%s1 + $0x308] sm:$0xff]
        %v531 = vunpack.c.l.b16 %v335
        %v532 = vunpack.c.h.b16 %v335
        %v533 = vunpack.c.l.b16 %v336
        %v534 = vunpack.c.h.b16 %v336
        %v535 = vunpack.c.l.b16 %v337
        %v536 = vunpack.c.h.b16 %v337
        %v537 = vunpack.c.l.b16 %v338
        %v538 = vunpack.c.h.b16 %v338
        %v539 = vunpack.c.l.b16 %v339
        %v540 = vunpack.c.h.b16 %v339
        %v541 = vunpack.c.l.b16 %v340
        %v542 = vunpack.c.h.b16 %v340
        %v543 = vunpack.c.l.b16 %v341
        %v544 = vunpack.c.h.b16 %v341
        %v545 = vunpack.c.l.b16 %v342
        %v546 = vunpack.c.h.b16 %v342
        %v547 = vunpack.c.l.b16 %v343
        %v548 = vunpack.c.h.b16 %v343
        %v549 = vunpack.c.l.b16 %v344
        %v550 = vunpack.c.h.b16 %v344
        %v551 = vunpack.c.l.b16 %v345
        %v552 = vunpack.c.h.b16 %v345
        %v553 = vunpack.c.l.b16 %v346
        %v554 = vunpack.c.h.b16 %v346
        %v555 = vunpack.c.l.b16 %v347
        %v556 = vunpack.c.h.b16 %v347
        %v557 = vunpack.c.l.b16 %v348
        %v558 = vunpack.c.h.b16 %v348
        %v559 = vunpack.c.l.b16 %v349
        %v560 = vunpack.c.h.b16 %v349
        %v561 = vunpack.c.l.b16 %v350
        %v562 = vunpack.c.h.b16 %v350
        %v563 = vunpack.c.l.b16 %v351
        %v564 = vunpack.c.h.b16 %v351
        %v565 = vunpack.c.l.b16 %v352
        %v566 = vunpack.c.h.b16 %v352
        %v567 = vunpack.c.l.b16 %v353
        %v568 = vunpack.c.h.b16 %v353
        %v569 = vunpack.c.l.b16 %v354
        %v570 = vunpack.c.h.b16 %v354
        %v571 = vunpack.c.l.b16 %v355
        %v572 = vunpack.c.h.b16 %v355
        %v573 = vunpack.c.l.b16 %v356
        %v574 = vunpack.c.h.b16 %v356
        %v575 = vunpack.c.l.b16 %v357
        %v576 = vunpack.c.h.b16 %v357
        %v577 = vunpack.c.l.b16 %v358
        %v578 = vunpack.c.h.b16 %v358
        %v579 = vunpack.c.l.b16 %v359
        %v580 = vunpack.c.h.b16 %v359
        %v581 = vunpack.c.l.b16 %v360
        %v582 = vunpack.c.h.b16 %v360
        %v583 = vunpack.c.l.b16 %v361
        %v584 = vunpack.c.h.b16 %v361
        %v585 = vunpack.c.l.b16 %v362
        %v586 = vunpack.c.h.b16 %v362
        %v587 = vunpack.c.l.b16 %v363
        %v588 = vunpack.c.h.b16 %v363
        %v589 = vunpack.c.l.b16 %v364
        %v590 = vunpack.c.h.b16 %v364
        %v591 = vunpack.c.l.b16 %v365
        %v592 = vunpack.c.h.b16 %v365
        %v593 = vunpack.c.l.b16 %v366
        %v594 = vunpack.c.h.b16 %v366
        %v595 = vunpack.c.l.b16 %v367
        %v596 = vunpack.c.h.b16 %v367
        %v597 = vunpack.c.l.b16 %v368
        %v598 = vunpack.c.h.b16 %v368
        %v599 = vunpack.c.l.b16 %v369
        %v600 = vunpack.c.h.b16 %v369
        %v601 = vunpack.c.l.b16 %v370
        %v602 = vunpack.c.h.b16 %v370
        %v603 = vunpack.c.l.b16 %v371
        %v604 = vunpack.c.h.b16 %v371
        %v605 = vunpack.c.l.b16 %v372
        %v606 = vunpack.c.h.b16 %v372
        %v607 = vunpack.c.l.b16 %v373
        %v608 = vunpack.c.h.b16 %v373
        %v609 = vunpack.c.l.b16 %v374
        %v610 = vunpack.c.h.b16 %v374
        %v611 = vunpack.c.l.b16 %v375
        %v612 = vunpack.c.h.b16 %v375
        %v613 = vunpack.c.l.b16 %v376
        %v614 = vunpack.c.h.b16 %v376
        %v615 = vunpack.c.l.b16 %v377
        %v616 = vunpack.c.h.b16 %v377
        %v617 = vunpack.c.l.b16 %v378
        %v618 = vunpack.c.h.b16 %v378
        %v619 = vunpack.c.l.b16 %v379
        %v620 = vunpack.c.h.b16 %v379
        %v621 = vunpack.c.l.b16 %v380
        %v622 = vunpack.c.h.b16 %v380
        %v623 = vunpack.c.l.b16 %v381
        %v624 = vunpack.c.h.b16 %v381
        %v625 = vunpack.c.l.b16 %v382
        %v626 = vunpack.c.h.b16 %v382
        %v627 = vunpack.c.l.b16 %v383
        %v628 = vunpack.c.h.b16 %v383
        %v629 = vunpack.c.l.b16 %v384
        %v630 = vunpack.c.h.b16 %v384
        %v631 = vunpack.c.l.b16 %v385
        %v632 = vunpack.c.h.b16 %v385
        %v633 = vunpack.c.l.b16 %v386
        %v634 = vunpack.c.h.b16 %v386
        %v635 = vunpack.c.l.b16 %v387
        %v636 = vunpack.c.h.b16 %v387
        %v637 = vunpack.c.l.b16 %v388
        %v638 = vunpack.c.h.b16 %v388
        %v639 = vunpack.c.l.b16 %v389
        %v640 = vunpack.c.h.b16 %v389
        %v641 = vunpack.c.l.b16 %v390
        %v642 = vunpack.c.h.b16 %v390
        %v643 = vunpack.c.l.b16 %v391
        %v644 = vunpack.c.h.b16 %v391
        %v645 = vunpack.c.l.b16 %v392
        %v646 = vunpack.c.h.b16 %v392
        %v647 = vunpack.c.l.b16 %v393
        %v648 = vunpack.c.h.b16 %v393
        %v649 = vunpack.c.l.b16 %v394
        %v650 = vunpack.c.h.b16 %v394
        %v651 = vunpack.c.l.b16 %v395
        %v652 = vunpack.c.h.b16 %v395
        %v653 = vunpack.c.l.b16 %v396
        %v654 = vunpack.c.h.b16 %v396
        %v655 = vunpack.c.l.b16 %v397
        %v656 = vunpack.c.h.b16 %v397
        %v657 = vunpack.c.l.b16 %v398
        %v658 = vunpack.c.h.b16 %v398
        %v659 = vunpack.c.l.b16 %v399
        %v660 = vunpack.c.h.b16 %v399
        %v661 = vunpack.c.l.b16 %v400
        %v662 = vunpack.c.h.b16 %v400
        %v663 = vunpack.c.l.b16 %v401
        %v664 = vunpack.c.h.b16 %v401
        %v665 = vunpack.c.l.b16 %v402
        %v666 = vunpack.c.h.b16 %v402
        %v667 = vunpack.c.l.b16 %v403
        %v668 = vunpack.c.h.b16 %v403
        %v669 = vunpack.c.l.b16 %v404
        %v670 = vunpack.c.h.b16 %v404
        %v671 = vunpack.c.l.b16 %v405
        %v672 = vunpack.c.h.b16 %v405
        %v673 = vunpack.c.l.b16 %v406
        %v674 = vunpack.c.h.b16 %v406
        %v675 = vunpack.c.l.b16 %v407
        %v676 = vunpack.c.h.b16 %v407
        %v677 = vunpack.c.l.b16 %v408
        %v678 = vunpack.c.h.b16 %v408
        %v679 = vunpack.c.l.b16 %v409
        %v680 = vunpack.c.h.b16 %v409
        %v681 = vunpack.c.l.b16 %v410
        %v682 = vunpack.c.h.b16 %v410
        %v683 = vunpack.c.l.b16 %v411
        %v684 = vunpack.c.h.b16 %v411
        %v685 = vunpack.c.l.b16 %v412
        %v686 = vunpack.c.h.b16 %v412
        %v687 = vunpack.c.l.b16 %v413
        %v688 = vunpack.c.h.b16 %v413
        %v689 = vunpack.c.l.b16 %v414
        %v690 = vunpack.c.h.b16 %v414
        %v691 = vunpack.c.l.b16 %v415
        %v692 = vunpack.c.h.b16 %v415
        %v693 = vunpack.c.l.b16 %v416
        %v694 = vunpack.c.h.b16 %v416
        %v695 = vunpack.c.l.b16 %v417
        %v696 = vunpack.c.h.b16 %v417
        %v697 = vunpack.c.l.b16 %v418
        %v698 = vunpack.c.h.b16 %v418
        %v699 = vunpack.c.l.b16 %v419
        %v700 = vunpack.c.h.b16 %v419
        %v701 = vunpack.c.l.b16 %v420
        %v702 = vunpack.c.h.b16 %v420
        %v703 = vunpack.c.l.b16 %v421
        %v704 = vunpack.c.h.b16 %v421
        %v705 = vunpack.c.l.b16 %v422
        %v706 = vunpack.c.h.b16 %v422
        %v707 = vunpack.c.l.b16 %v423
        %v708 = vunpack.c.h.b16 %v423
        %v709 = vunpack.c.l.b16 %v424
        %v710 = vunpack.c.h.b16 %v424
        %v711 = vunpack.c.l.b16 %v425
        %v712 = vunpack.c.h.b16 %v425
        %v713 = vunpack.c.l.b16 %v426
        %v714 = vunpack.c.h.b16 %v426
        %v715 = vunpack.c.l.b16 %v427
        %v716 = vunpack.c.h.b16 %v427
        %v717 = vunpack.c.l.b16 %v428
        %v718 = vunpack.c.h.b16 %v428
        %v719 = vunpack.c.l.b16 %v429
        %v720 = vunpack.c.h.b16 %v429
        %v721 = vunpack.c.l.b16 %v430
        %v722 = vunpack.c.h.b16 %v430
        %v723 = vunpack.c.l.b16 %v431
        %v724 = vunpack.c.h.b16 %v431
        %v725 = vunpack.c.l.b16 %v432
        %v726 = vunpack.c.h.b16 %v432
        %v727 = vpack.c.b16 %v533, %v531
        %v728 = vpack.c.b16 %v534, %v532
        %v729 = vpack.c.b16 %v537, %v535
        %v730 = vpack.c.b16 %v538, %v536
        %v731 = vpack.c.b16 %v541, %v539
        %v732 = vpack.c.b16 %v542, %v540
        %v733 = vpack.c.b16 %v545, %v543
        %v734 = vpack.c.b16 %v546, %v544
        %v735 = vpack.c.b16 %v549, %v547
        %v736 = vpack.c.b16 %v550, %v548
        %v737 = vpack.c.b16 %v553, %v551
        %v738 = vpack.c.b16 %v554, %v552
        %v739 = vpack.c.b16 %v557, %v555
        %v740 = vpack.c.b16 %v558, %v556
        %v741 = vpack.c.b16 %v561, %v559
        %v742 = vpack.c.b16 %v562, %v560
        %v743 = vpack.c.b16 %v565, %v563
        %v744 = vpack.c.b16 %v566, %v564
        %v745 = vpack.c.b16 %v569, %v567
        %v746 = vpack.c.b16 %v570, %v568
        %v747 = vpack.c.b16 %v573, %v571
        %v748 = vpack.c.b16 %v574, %v572
        %v749 = vpack.c.b16 %v577, %v575
        %v750 = vpack.c.b16 %v578, %v576
        %v751 = vpack.c.b16 %v581, %v579
        %v752 = vpack.c.b16 %v582, %v580
        %v753 = vpack.c.b16 %v585, %v583
        %v754 = vpack.c.b16 %v586, %v584
        %v755 = vpack.c.b16 %v589, %v587
        %v756 = vpack.c.b16 %v590, %v588
        %v757 = vpack.c.b16 %v593, %v591
        %v758 = vpack.c.b16 %v594, %v592
        %v759 = vpack.c.b16 %v597, %v595
        %v760 = vpack.c.b16 %v598, %v596
        %v761 = vpack.c.b16 %v601, %v599
        %v762 = vpack.c.b16 %v602, %v600
        %v763 = vpack.c.b16 %v605, %v603
        %v764 = vpack.c.b16 %v606, %v604
        %v765 = vpack.c.b16 %v609, %v607
        %v766 = vpack.c.b16 %v610, %v608
        %v767 = vpack.c.b16 %v613, %v611
        %v768 = vpack.c.b16 %v614, %v612
        %v769 = vpack.c.b16 %v617, %v615
        %v770 = vpack.c.b16 %v618, %v616
        %v771 = vpack.c.b16 %v621, %v619
        %v772 = vpack.c.b16 %v622, %v620
        %v773 = vpack.c.b16 %v625, %v623
        %v774 = vpack.c.b16 %v626, %v624
        %v775 = vpack.c.b16 %v629, %v627
        %v776 = vpack.c.b16 %v630, %v628
        %v777 = vpack.c.b16 %v633, %v631
        %v778 = vpack.c.b16 %v634, %v632
        %v779 = vpack.c.b16 %v637, %v635
        %v780 = vpack.c.b16 %v638, %v636
        %v781 = vpack.c.b16 %v641, %v639
        %v782 = vpack.c.b16 %v642, %v640
        %v783 = vpack.c.b16 %v645, %v643
        %v784 = vpack.c.b16 %v646, %v644
        %v785 = vpack.c.b16 %v649, %v647
        %v786 = vpack.c.b16 %v650, %v648
        %v787 = vpack.c.b16 %v653, %v651
        %v788 = vpack.c.b16 %v654, %v652
        %v789 = vpack.c.b16 %v657, %v655
        %v790 = vpack.c.b16 %v658, %v656
        %v791 = vpack.c.b16 %v661, %v659
        %v792 = vpack.c.b16 %v662, %v660
        %v793 = vpack.c.b16 %v665, %v663
        %v794 = vpack.c.b16 %v666, %v664
        %v795 = vpack.c.b16 %v669, %v667
        %v796 = vpack.c.b16 %v670, %v668
        %v797 = vpack.c.b16 %v673, %v671
        %v798 = vpack.c.b16 %v674, %v672
        %v799 = vpack.c.b16 %v677, %v675
        %v800 = vpack.c.b16 %v678, %v676
        %v801 = vpack.c.b16 %v681, %v679
        %v802 = vpack.c.b16 %v682, %v680
        %v803 = vpack.c.b16 %v685, %v683
        %v804 = vpack.c.b16 %v686, %v684
        %v805 = vpack.c.b16 %v689, %v687
        %v806 = vpack.c.b16 %v690, %v688
        %v807 = vpack.c.b16 %v693, %v691
        %v808 = vpack.c.b16 %v694, %v692
        %v809 = vpack.c.b16 %v697, %v695
        %v810 = vpack.c.b16 %v698, %v696
        %v811 = vpack.c.b16 %v701, %v699
        %v812 = vpack.c.b16 %v702, %v700
        %v813 = vpack.c.b16 %v705, %v703
        %v814 = vpack.c.b16 %v706, %v704
        %v815 = vpack.c.b16 %v709, %v707
        %v816 = vpack.c.b16 %v710, %v708
        %v817 = vpack.c.b16 %v713, %v711
        %v818 = vpack.c.b16 %v714, %v712
        %v819 = vpack.c.b16 %v717, %v715
        %v820 = vpack.c.b16 %v718, %v716
        %v821 = vpack.c.b16 %v721, %v719
        %v822 = vpack.c.b16 %v722, %v720
        %v823 = vpack.c.b16 %v725, %v723
        %v824 = vpack.c.b16 %v726, %v724
        %vm923 = vcmask 130048
        %v925 = vsel %vm923, %v334, 0
        %927 = vmatprep.subr.bf16.mxu0 %v728
        %928 = vmatpush1.bf16.msra.mxu0 %v727
        %929 = vmatprep.subr.bf16.mxu0 %v730
        %930 = vmatpush1.bf16.msra.mxu0 %v729
        %931 = vmatprep.subr.bf16.mxu0 %v732
        %932 = vmatpush1.bf16.msra.mxu0 %v731
        %933 = vmatprep.subr.bf16.mxu0 %v734
        %934 = vmatpush1.bf16.msra.mxu0 %v733
        %935 = vmatprep.subr.bf16.mxu0 %v736
        %936 = vmatpush1.bf16.msra.mxu0 %v735
        %937 = vmatprep.subr.bf16.mxu0 %v738
        %938 = vmatpush1.bf16.msra.mxu0 %v737
        %939 = vmatprep.subr.bf16.mxu0 %v740
        %940 = vmatpush1.bf16.msra.mxu0 %v739
        %941 = vmatprep.subr.bf16.mxu0 %v742
        %942 = vmatpush1.bf16.msra.mxu0 %v741
        %943 = vmatprep.subr.bf16.mxu0 %v744
        %944 = vmatpush1.bf16.msra.mxu0 %v743
        %945 = vmatprep.subr.bf16.mxu0 %v746
        %946 = vmatpush1.bf16.msra.mxu0 %v745
        %947 = vmatprep.subr.bf16.mxu0 %v748
        %948 = vmatpush1.bf16.msra.mxu0 %v747
        %949 = vmatprep.subr.bf16.mxu0 %v750
        %950 = vmatpush1.bf16.msra.mxu0 %v749
        %951 = vmatprep.subr.bf16.mxu0 %v752
        %952 = vmatpush1.bf16.msra.mxu0 %v751
        %953 = vmatprep.subr.bf16.mxu0 %v754
        %954 = vmatpush1.bf16.msra.mxu0 %v753
        %955 = vmatprep.subr.bf16.mxu0 %v756
        %956 = vmatpush1.bf16.msra.mxu0 %v755
        %957 = vmatprep.subr.bf16.mxu0 %v758
        %958 = vmatpush1.bf16.msra.mxu0 %v757
        %959 = vmatprep.mubr.bf16.mxu0 %v329
        %960 = vmatmul.mubr.bf16.gmra.mrb[0].mxu0 %v328
        %v961 = vpop.f32.mrb[0].mxu0
        %v962 = vadd.f32 0.0, %v961
        %v963 = vpop.f32.mrb[0].mxu0
        %v964 = vadd.f32 0.0, %v963
        %v965 = vpop.f32.mrb[0].mxu0
        %v966 = vpop.f32.mrb[0].mxu0
        %967 = vdwg.mxu0
        %968 = vmatprep.subr.bf16.mxu0 %v760
        %969 = vmatpush1.bf16.msra.mxu0 %v759
        %970 = vmatprep.subr.bf16.mxu0 %v762
        %971 = vmatpush1.bf16.msra.mxu0 %v761
        %972 = vmatprep.subr.bf16.mxu0 %v764
        %973 = vmatpush1.bf16.msra.mxu0 %v763
        %974 = vmatprep.subr.bf16.mxu0 %v766
        %975 = vmatpush1.bf16.msra.mxu0 %v765
        %976 = vmatprep.subr.bf16.mxu0 %v768
        %977 = vmatpush1.bf16.msra.mxu0 %v767
        %978 = vmatprep.subr.bf16.mxu0 %v770
        %979 = vmatpush1.bf16.msra.mxu0 %v769
        %980 = vmatprep.subr.bf16.mxu0 %v772
        %981 = vmatpush1.bf16.msra.mxu0 %v771
        %982 = vmatprep.subr.bf16.mxu0 %v774
        %983 = vmatpush1.bf16.msra.mxu0 %v773
        %984 = vmatprep.subr.bf16.mxu0 %v776
        %985 = vmatpush1.bf16.msra.mxu0 %v775
        %986 = vmatprep.subr.bf16.mxu0 %v778
        %987 = vmatpush1.bf16.msra.mxu0 %v777
        %988 = vmatprep.subr.bf16.mxu0 %v780
        %989 = vmatpush1.bf16.msra.mxu0 %v779
        %990 = vmatprep.subr.bf16.mxu0 %v782
        %991 = vmatpush1.bf16.msra.mxu0 %v781
        %992 = vmatprep.subr.bf16.mxu0 %v784
        %993 = vmatpush1.bf16.msra.mxu0 %v783
        %994 = vmatprep.subr.bf16.mxu0 %v786
        %995 = vmatpush1.bf16.msra.mxu0 %v785
        %996 = vmatprep.subr.bf16.mxu0 %v788
        %997 = vmatpush1.bf16.msra.mxu0 %v787
        %998 = vmatprep.subr.bf16.mxu0 %v790
        %999 = vmatpush1.bf16.msra.mxu0 %v789
        %1000 = vmatprep.mubr.bf16.mxu0 %v331
        %1001 = vmatmul.mubr.bf16.gmra.mrb[0].mxu0 %v330
        %v1002 = vpop.f32.mrb[0].mxu0
        %v1003 = vadd.f32 %v962, %v1002
        %v1004 = vpop.f32.mrb[0].mxu0
        %v1005 = vadd.f32 %v964, %v1004
        %v1006 = vpop.f32.mrb[0].mxu0
        %v1007 = vpop.f32.mrb[0].mxu0
        %1008 = vdwg.mxu0
        %1009 = vmatprep.subr.bf16.mxu0 %v792
        %1010 = vmatpush1.bf16.msra.mxu0 %v791
        %1011 = vmatprep.subr.bf16.mxu0 %v794
        %1012 = vmatpush1.bf16.msra.mxu0 %v793
        %1013 = vmatprep.subr.bf16.mxu0 %v796
        %1014 = vmatpush1.bf16.msra.mxu0 %v795
        %1015 = vmatprep.subr.bf16.mxu0 %v798
        %1016 = vmatpush1.bf16.msra.mxu0 %v797
        %1017 = vmatprep.subr.bf16.mxu0 %v800
        %1018 = vmatpush1.bf16.msra.mxu0 %v799
        %1019 = vmatprep.subr.bf16.mxu0 %v802
        %1020 = vmatpush1.bf16.msra.mxu0 %v801
        %1021 = vmatprep.subr.bf16.mxu0 %v804
        %1022 = vmatpush1.bf16.msra.mxu0 %v803
        %1023 = vmatprep.subr.bf16.mxu0 %v806
        %1024 = vmatpush1.bf16.msra.mxu0 %v805
        %1025 = vmatprep.subr.bf16.mxu0 %v808
        %1026 = vmatpush1.bf16.msra.mxu0 %v807
        %1027 = vmatprep.subr.bf16.mxu0 %v810
        %1028 = vmatpush1.bf16.msra.mxu0 %v809
        %1029 = vmatprep.subr.bf16.mxu0 %v812
        %1030 = vmatpush1.bf16.msra.mxu0 %v811
        %1031 = vmatprep.subr.bf16.mxu0 %v814
        %1032 = vmatpush1.bf16.msra.mxu0 %v813
        %1033 = vmatprep.subr.bf16.mxu0 %v816
        %1034 = vmatpush1.bf16.msra.mxu0 %v815
        %1035 = vmatprep.subr.bf16.mxu0 %v818
        %1036 = vmatpush1.bf16.msra.mxu0 %v817
        %1037 = vmatprep.subr.bf16.mxu0 %v820
        %1038 = vmatpush1.bf16.msra.mxu0 %v819
        %1039 = vmatprep.subr.bf16.mxu0 %v822
        %1040 = vmatpush1.bf16.msra.mxu0 %v821
        %1041 = vmatprep.mubr.bf16.mxu0 %v333
        %1042 = vmatmul.mubr.bf16.gmra.mrb[0].mxu0 %v332
        %v1043 = vpop.f32.mrb[0].mxu0
        %v1044 = vadd.f32 %v1003, %v1043
        %v1045 = vpop.f32.mrb[0].mxu0
        %v1046 = vadd.f32 %v1005, %v1045
        %v1047 = vpop.f32.mrb[0].mxu0
        %v1048 = vpop.f32.mrb[0].mxu0
        %1049 = vdwg.mxu0
        %1050 = vmatprep.subr.bf16.mxu0 %v824
        %1051 = vmatpush1.bf16.msra.mxu0 %v823
        %1052 = vmatprep.subr.bf16.mxu0 0
        %1053 = vmatpush1.bf16.msra.mxu0 0
        %1054 = vmatprep.subr.bf16.mxu0 0
        %1055 = vmatpush1.bf16.msra.mxu0 0
        %1056 = vmatprep.subr.bf16.mxu0 0
        %1057 = vmatpush1.bf16.msra.mxu0 0
        %1058 = vmatprep.subr.bf16.mxu0 0
        %1059 = vmatpush1.bf16.msra.mxu0 0
        %1060 = vmatprep.subr.bf16.mxu0 0
        %1061 = vmatpush1.bf16.msra.mxu0 0
        %1062 = vmatprep.subr.bf16.mxu0 0
        %1063 = vmatpush1.bf16.msra.mxu0 0
        %1064 = vmatprep.subr.bf16.mxu0 0
        %1065 = vmatpush1.bf16.msra.mxu0 0
        %1066 = vmatprep.subr.bf16.mxu0 0
        %1067 = vmatpush1.bf16.msra.mxu0 0
        %1068 = vmatprep.subr.bf16.mxu0 0
        %1069 = vmatpush1.bf16.msra.mxu0 0
        %1070 = vmatprep.subr.bf16.mxu0 0
        %1071 = vmatpush1.bf16.msra.mxu0 0
        %1072 = vmatprep.subr.bf16.mxu0 0
        %1073 = vmatpush1.bf16.msra.mxu0 0
        %1074 = vmatprep.subr.bf16.mxu0 0
        %1075 = vmatpush1.bf16.msra.mxu0 0
        %1076 = vmatprep.subr.bf16.mxu0 0
        %1077 = vmatpush1.bf16.msra.mxu0 0
        %1078 = vmatprep.subr.bf16.mxu0 0
        %1079 = vmatpush1.bf16.msra.mxu0 0
        %1080 = vmatprep.subr.bf16.mxu0 0
        %1081 = vmatpush1.bf16.msra.mxu0 0
        %1082 = vmatprep.mubr.bf16.mxu0 0
        %1083 = vmatmul.mubr.bf16.gmra.mrb[0].mxu0 %v925
        %v1084 = vpop.f32.mrb[0].mxu0
        %v1085 = vadd.f32 %v1044, %v1084
        %v1086 = vpop.f32.mrb[0].mxu0
        %v1087 = vadd.f32 %v1046, %v1086
        %v1088 = vpop.f32.mrb[0].mxu0
        %v1089 = vpop.f32.mrb[0].mxu0
        %1090 = vdwg.mxu0
        // Predicated region
        $region61: #{mlp_forward.1} parent=43 // pred_check
          %p1091 = pneg %p313
        $region62: #{mlp_forward.1} parent=43 // pred_check_branch
          %1093 = sbr.rel (%p1091) target = $region64
        $region63: #{mlp_forward.1} parent=43 // pred_region
          %v1094 = vld [vmem:[#allocation2] ss:$2 sm:$0x3]
          %v1095 = vrot.slane %v1085, 4
          %v1096 = vadd.f32 %v1085, %v1095
          %v1097 = vrot.slane %v1096, 2
          %v1098 = vadd.f32 %v1096, %v1097
          %v1099 = vrot.slane %v1098, 1
          %v1100 = vadd.f32 %v1098, %v1099
          %v1101 = vrot.slane %v1087, 4
          %v1102 = vadd.f32 %v1087, %v1101
          %v1103 = vrot.slane %v1102, 2
          %v1104 = vadd.f32 %v1102, %v1103
          %v1105 = vrot.slane %v1104, 1
          %v1106 = vadd.f32 %v1104, %v1105
          %v1109 = vcombine.low %v1100, %v1106
          %v1111 = vunpack.c.l.s4 1966171168
          %v1112 = vunpack.c.0.s8 %v1111
          %v1113 = vlaneseq
          %v1114 = vshrl.u32 %v1113, 7
          %v1115 = vsub.s32 %v1112, %v1114
          %v1116 = vrot.slane %v1109, %v1115
          %v1118 = vunpack.c.l.s4 1966171168
          %v1119 = vunpack.c.0.s8 %v1118
          %v1120 = vlaneseq
          %v1121 = vshrl.u32 %v1120, 7
          %v1122 = vsub.s32 %v1119, %v1121
          %v1123 = vrot.slane %v1116, %v1122
          %v1125 = vadd.f32 %v1094, %v1123
          %v1126 = vlaneseq
          %vm1127 = vcmp.ge.s32.totalorder %v1126, 0
          %vm1128 = vcmp.lt.s32.totalorder %v1126, 256
          %vm1129 = vmand %vm1127, %vm1128
          %1130 = vst.msk [vmem:[#allocation2] ss:$2 sm:$0x3] %vm1129, %v1125
          %s1131 = scalar_lea.vmem [#allocation2], 1
          %v1132 = vld [vmem:[%s1131] ss:$2 sm:$0x3]
          %v1133 = vmul.f32 %v1085, %v1085
          %v1134 = vmul.f32 %v1087, %v1087
          %v1135 = vrot.slane %v1133, 4
          %v1136 = vadd.f32 %v1133, %v1135
          %v1137 = vrot.slane %v1136, 2
          %v1138 = vadd.f32 %v1136, %v1137
          %v1139 = vrot.slane %v1138, 1
          %v1140 = vadd.f32 %v1138, %v1139
          %v1141 = vrot.slane %v1134, 4
          %v1142 = vadd.f32 %v1134, %v1141
          %v1143 = vrot.slane %v1142, 2
          %v1144 = vadd.f32 %v1142, %v1143
          %v1145 = vrot.slane %v1144, 1
          %v1146 = vadd.f32 %v1144, %v1145
          %v1149 = vcombine.low %v1140, %v1146
          %v1151 = vunpack.c.l.s4 1966171168
          %v1152 = vunpack.c.0.s8 %v1151
          %v1153 = vlaneseq
          %v1154 = vshrl.u32 %v1153, 7
          %v1155 = vsub.s32 %v1152, %v1154
          %v1156 = vrot.slane %v1149, %v1155
          %v1158 = vunpack.c.l.s4 1966171168
          %v1159 = vunpack.c.0.s8 %v1158
          %v1160 = vlaneseq
          %v1161 = vshrl.u32 %v1160, 7
          %v1162 = vsub.s32 %v1159, %v1161
          %v1163 = vrot.slane %v1156, %v1162
          %v1165 = vadd.f32 %v1132, %v1163
          %1166 = vst.msk [vmem:[%s1131] ss:$2 sm:$0x3] %vm1129, %v1165
        $region64: #{mlp_forward.1} parent=43 // pred_fallthru
          _
        %p1167 = scmp.eq.s32.totalorder %s26, 1
        // Predicated region
        $region65: #{mlp_forward.1} parent=43 // pred_check
          %p1168 = pneg %p1167
        $region66: #{mlp_forward.1} parent=43 // pred_check_branch
          %1170 = sbr.rel (%p1168) target = $region68
        $region67: #{mlp_forward.1} parent=43 // pred_region
          %v1171 = vld [vmem:[#allocation2] ss:$2 sm:$0x3]
          %v1172 = vmul.f32 %v1171, 0.125
          %s1173 = scalar_lea.vmem [#allocation2], 1
          %v1174 = vld [vmem:[%s1173] ss:$2 sm:$0x3]
          %v1175 = vmul.f32 %v1174, 0.125
          %v1176 = vmul.f32 %v1172, %v1172
          %v1177 = vsub.f32 %v1175, %v1176
          %v1178 = vmax.f32 %v1177, 0.0
          %v1179 = vld [vmem:[%s5] ss:$8 sm:$0x3]
          %v1180 = vadd.f32 %v1178, 1e-05
          %v1181 = vrsqrt.pop %v1180
          %v1182 = vmul.f32 %v1179, %v1181
          %s1183 = scalar_lea.vmem %s5, 1
          %v1184 = vld [vmem:[%s1183] ss:$8 sm:$0x3]
          %v1185 = vmul.f32 %v1172, %v1182
          %v1186 = vsub.f32 %v1184, %v1185
          %v1188 = vlaneseq
          %v1189 = vshrl.u32 %v1188, 7
          %v1190 = vsub.s32 0, %v1189
          %v1191 = vrot.slane %v1182, %v1190
          %v1192 = vlaneseq
          %v1193 = vshrl.u32 %v1192, 7
          %v1194 = vsub.s32 1, %v1193
          %v1195 = vrot.slane %v1182, %v1194
          %v1198 = vmul.f32 %v1085, %v1191
          %v1199 = vmul.f32 %v1087, %v1195
          %v1201 = vlaneseq
          %v1202 = vshrl.u32 %v1201, 7
          %v1203 = vsub.s32 0, %v1202
          %v1204 = vrot.slane %v1186, %v1203
          %v1205 = vlaneseq
          %v1206 = vshrl.u32 %v1205, 7
          %v1207 = vsub.s32 1, %v1206
          %v1208 = vrot.slane %v1186, %v1207
          %v1211 = vadd.f32 %v1198, %v1204
          %v1212 = vadd.f32 %v1199, %v1208
          %v1213 = vmax.f32 %v1211, 0.0
          %v1214 = vmax.f32 %v1212, 0.0
          %v1215 = vpack.c.bf16 %v1213, %v1213
          %v1216 = vpack.c.bf16 %v1214, %v1214
          %v1217 = vld [vmem:[#allocation4] sm:$0xf]
          %v1218 = vld [vmem:[#allocation4 + $0x4] sm:$0xf]
          %v1219 = vld [vmem:[#allocation4 + $0x8] sm:$0xf]
          %v1220 = vld [vmem:[#allocation4 + $0xc] sm:$0xf]
          %v1221 = vld [vmem:[#allocation4 + $0x10] sm:$0xf]
          %v1222 = vld [vmem:[#allocation4 + $0x14] sm:$0xf]
          %v1223 = vld [vmem:[#allocation4 + $0x18] sm:$0xf]
          %v1224 = vld [vmem:[#allocation4 + $0x1c] sm:$0xf]
          %v1225 = vld [vmem:[#allocation4 + $0x20] sm:$0xf]
          %v1226 = vld [vmem:[#allocation4 + $0x24] sm:$0xf]
          %v1227 = vld [vmem:[#allocation4 + $0x28] sm:$0xf]
          %v1228 = vld [vmem:[#allocation4 + $0x2c] sm:$0xf]
          %v1229 = vld [vmem:[#allocation4 + $0x30] sm:$0xf]
          %v1230 = vld [vmem:[#allocation4 + $0x34] sm:$0xf]
          %v1231 = vld [vmem:[#allocation4 + $0x38] sm:$0xf]
          %v1232 = vld [vmem:[#allocation4 + $0x3c] sm:$0xf]
          %v1233 = vld [vmem:[#allocation4 + $0x40] sm:$0xf]
          %v1234 = vld [vmem:[#allocation4 + $0x44] sm:$0xf]
          %v1235 = vld [vmem:[#allocation4 + $0x48] sm:$0xf]
          %v1236 = vld [vmem:[#allocation4 + $0x4c] sm:$0xf]
          %v1237 = vld [vmem:[#allocation4 + $0x50] sm:$0xf]
          %v1238 = vld [vmem:[#allocation4 + $0x54] sm:$0xf]
          %v1239 = vld [vmem:[#allocation4 + $0x58] sm:$0xf]
          %v1240 = vld [vmem:[#allocation4 + $0x5c] sm:$0xf]
          %v1241 = vld [vmem:[#allocation4 + $0x60] sm:$0xf]
          %v1242 = vld [vmem:[#allocation4 + $0x64] sm:$0xf]
          %v1243 = vld [vmem:[#allocation4 + $0x68] sm:$0xf]
          %v1244 = vld [vmem:[#allocation4 + $0x6c] sm:$0xf]
          %v1245 = vld [vmem:[#allocation4 + $0x70] sm:$0xf]
          %v1246 = vld [vmem:[#allocation4 + $0x74] sm:$0xf]
          %v1247 = vld [vmem:[#allocation4 + $0x78] sm:$0xf]
          %v1248 = vld [vmem:[#allocation4 + $0x7c] sm:$0xf]
          %v1281 = vunpack.c.l.b16 %v1217
          %v1282 = vunpack.c.l.b16 %v1218
          %v1283 = vunpack.c.l.b16 %v1219
          %v1284 = vunpack.c.l.b16 %v1220
          %v1285 = vunpack.c.l.b16 %v1221
          %v1286 = vunpack.c.l.b16 %v1222
          %v1287 = vunpack.c.l.b16 %v1223
          %v1288 = vunpack.c.l.b16 %v1224
          %v1289 = vunpack.c.l.b16 %v1225
          %v1290 = vunpack.c.l.b16 %v1226
          %v1291 = vunpack.c.l.b16 %v1227
          %v1292 = vunpack.c.l.b16 %v1228
          %v1293 = vunpack.c.l.b16 %v1229
          %v1294 = vunpack.c.l.b16 %v1230
          %v1295 = vunpack.c.l.b16 %v1231
          %v1296 = vunpack.c.l.b16 %v1232
          %v1297 = vunpack.c.l.b16 %v1233
          %v1298 = vunpack.c.l.b16 %v1234
          %v1299 = vunpack.c.l.b16 %v1235
          %v1300 = vunpack.c.l.b16 %v1236
          %v1301 = vunpack.c.l.b16 %v1237
          %v1302 = vunpack.c.l.b16 %v1238
          %v1303 = vunpack.c.l.b16 %v1239
          %v1304 = vunpack.c.l.b16 %v1240
          %v1305 = vunpack.c.l.b16 %v1241
          %v1306 = vunpack.c.l.b16 %v1242
          %v1307 = vunpack.c.l.b16 %v1243
          %v1308 = vunpack.c.l.b16 %v1244
          %v1309 = vunpack.c.l.b16 %v1245
          %v1310 = vunpack.c.l.b16 %v1246
          %v1311 = vunpack.c.l.b16 %v1247
          %v1312 = vunpack.c.l.b16 %v1248
          %v1313 = vpack.c.b16 %v1282, %v1281
          %v1314 = vpack.c.b16 %v1284, %v1283
          %v1315 = vpack.c.b16 %v1286, %v1285
          %v1316 = vpack.c.b16 %v1288, %v1287
          %v1317 = vpack.c.b16 %v1290, %v1289
          %v1318 = vpack.c.b16 %v1292, %v1291
          %v1319 = vpack.c.b16 %v1294, %v1293
          %v1320 = vpack.c.b16 %v1296, %v1295
          %v1321 = vpack.c.b16 %v1298, %v1297
          %v1322 = vpack.c.b16 %v1300, %v1299
          %v1323 = vpack.c.b16 %v1302, %v1301
          %v1324 = vpack.c.b16 %v1304, %v1303
          %v1325 = vpack.c.b16 %v1306, %v1305
          %v1326 = vpack.c.b16 %v1308, %v1307
          %v1327 = vpack.c.b16 %v1310, %v1309
          %v1328 = vpack.c.b16 %v1312, %v1311
          %1345 = vmatprep.subr.bf16.mxu0 0
          %1346 = vmatpush1.bf16.msra.mxu0 %v1313
          %1347 = vmatprep.subr.bf16.mxu0 0
          %1348 = vmatpush1.bf16.msra.mxu0 %v1314
          %1349 = vmatprep.subr.bf16.mxu0 0
          %1350 = vmatpush1.bf16.msra.mxu0 %v1315
          %1351 = vmatprep.subr.bf16.mxu0 0
          %1352 = vmatpush1.bf16.msra.mxu0 %v1316
          %1353 = vmatprep.subr.bf16.mxu0 0
          %1354 = vmatpush1.bf16.msra.mxu0 %v1317
          %1355 = vmatprep.subr.bf16.mxu0 0
          %1356 = vmatpush1.bf16.msra.mxu0 %v1318
          %1357 = vmatprep.subr.bf16.mxu0 0
          %1358 = vmatpush1.bf16.msra.mxu0 %v1319
          %1359 = vmatprep.subr.bf16.mxu0 0
          %1360 = vmatpush1.bf16.msra.mxu0 %v1320
          %1361 = vmatprep.subr.bf16.mxu0 0
          %1362 = vmatpush1.bf16.msra.mxu0 %v1321
          %1363 = vmatprep.subr.bf16.mxu0 0
          %1364 = vmatpush1.bf16.msra.mxu0 %v1322
          %1365 = vmatprep.subr.bf16.mxu0 0
          %1366 = vmatpush1.bf16.msra.mxu0 %v1323
          %1367 = vmatprep.subr.bf16.mxu0 0
          %1368 = vmatpush1.bf16.msra.mxu0 %v1324
          %1369 = vmatprep.subr.bf16.mxu0 0
          %1370 = vmatpush1.bf16.msra.mxu0 %v1325
          %1371 = vmatprep.subr.bf16.mxu0 0
          %1372 = vmatpush1.bf16.msra.mxu0 %v1326
          %1373 = vmatprep.subr.bf16.mxu0 0
          %1374 = vmatpush1.bf16.msra.mxu0 %v1327
          %1375 = vmatprep.subr.bf16.mxu0 0
          %1376 = vmatpush1.bf16.msra.mxu0 %v1328
          %1377 = vmatprep.mubr.bf16.mxu0 %v1216
          %1378 = vmatmul.mubr.bf16.gmra.mrb[0].mxu0 %v1215
          %v1379 = vpop.f32.mrb[0].mxu0
          %v1380 = vadd.f32 0.0, %v1379
          %v1381 = vpop.f32.mrb[0].mxu0
          %v1382 = vpop.f32.mrb[0].mxu0
          %v1383 = vpop.f32.mrb[0].mxu0
          %1384 = vdwg.mxu0
          %v1385 = vld [vmem:[#allocation3] sm:$0x1]
          %v1386 = vrot.slane %v1380, 4
          %v1387 = vadd.f32 %v1380, %v1386
          %v1388 = vrot.slane %v1387, 2
          %v1389 = vadd.f32 %v1387, %v1388
          %v1390 = vrot.slane %v1389, 1
          %v1391 = vadd.f32 %v1389, %v1390
          %v1392 = vadd.f32 %v1385, %v1391
          %1393 = vst [vmem:[#allocation3] sm:$0x1] %v1392
          %v1394 = vld [vmem:[#allocation3 + $0x1] sm:$0x1]
          %v1395 = vmul.f32 %v1380, %v1380
          %v1396 = vrot.slane %v1395, 4
          %v1397 = vadd.f32 %v1395, %v1396
          %v1398 = vrot.slane %v1397, 2
          %v1399 = vadd.f32 %v1397, %v1398
          %v1400 = vrot.slane %v1399, 1
          %v1401 = vadd.f32 %v1399, %v1400
          %v1402 = vadd.f32 %v1394, %v1401
          %1403 = vst [vmem:[#allocation3 + $0x1] sm:$0x1] %v1402
        $region68: #{mlp_forward.1} parent=43 // pred_fallthru
          _
        %p1404 = scmp.eq.s32.totalorder %s26, 2
        // Predicated region
        $region69: #{mlp_forward.1} parent=43 // pred_check
          %p1405 = pneg %p1404
        $region70: #{mlp_forward.1} parent=43 // pred_check_branch
          %1407 = sbr.rel (%p1405) target = $region72
        $region71: #{mlp_forward.1} parent=43 // pred_region
          %v1408 = vld [vmem:[#allocation2] ss:$2 sm:$0x3]
          %v1409 = vmul.f32 %v1408, 0.125
          %s1410 = scalar_lea.vmem [#allocation2], 1
          %v1411 = vld [vmem:[%s1410] ss:$2 sm:$0x3]
          %v1412 = vmul.f32 %v1411, 0.125
          %v1413 = vmul.f32 %v1409, %v1409
          %v1414 = vsub.f32 %v1412, %v1413
          %v1415 = vmax.f32 %v1414, 0.0
          %v1416 = vld [vmem:[%s5] ss:$8 sm:$0x3]
          %v1417 = vadd.f32 %v1415, 1e-05
          %v1418 = vrsqrt.pop %v1417
          %v1419 = vmul.f32 %v1416, %v1418
          %s1420 = scalar_lea.vmem %s5, 1
          %v1421 = vld [vmem:[%s1420] ss:$8 sm:$0x3]
          %v1422 = vmul.f32 %v1409, %v1419
          %v1423 = vsub.f32 %v1421, %v1422
          %v1425 = vlaneseq
          %v1426 = vshrl.u32 %v1425, 7
          %v1427 = vsub.s32 0, %v1426
          %v1428 = vrot.slane %v1419, %v1427
          %v1429 = vlaneseq
          %v1430 = vshrl.u32 %v1429, 7
          %v1431 = vsub.s32 1, %v1430
          %v1432 = vrot.slane %v1419, %v1431
          %v1435 = vmul.f32 %v1085, %v1428
          %v1436 = vmul.f32 %v1087, %v1432
          %v1438 = vlaneseq
          %v1439 = vshrl.u32 %v1438, 7
          %v1440 = vsub.s32 0, %v1439
          %v1441 = vrot.slane %v1423, %v1440
          %v1442 = vlaneseq
          %v1443 = vshrl.u32 %v1442, 7
          %v1444 = vsub.s32 1, %v1443
          %v1445 = vrot.slane %v1423, %v1444
          %v1448 = vadd.f32 %v1435, %v1441
          %v1449 = vadd.f32 %v1436, %v1445
          %v1450 = vmax.f32 %v1448, 0.0
          %v1451 = vmax.f32 %v1449, 0.0
          %v1452 = vpack.c.bf16 %v1450, %v1450
          %v1453 = vpack.c.bf16 %v1451, %v1451
          %v1454 = vld [vmem:[#allocation4] sm:$0xf]
          %v1455 = vld [vmem:[#allocation4 + $0x4] sm:$0xf]
          %v1456 = vld [vmem:[#allocation4 + $0x8] sm:$0xf]
          %v1457 = vld [vmem:[#allocation4 + $0xc] sm:$0xf]
          %v1458 = vld [vmem:[#allocation4 + $0x10] sm:$0xf]
          %v1459 = vld [vmem:[#allocation4 + $0x14] sm:$0xf]
          %v1460 = vld [vmem:[#allocation4 + $0x18] sm:$0xf]
          %v1461 = vld [vmem:[#allocation4 + $0x1c] sm:$0xf]
          %v1462 = vld [vmem:[#allocation4 + $0x20] sm:$0xf]
          %v1463 = vld [vmem:[#allocation4 + $0x24] sm:$0xf]
          %v1464 = vld [vmem:[#allocation4 + $0x28] sm:$0xf]
          %v1465 = vld [vmem:[#allocation4 + $0x2c] sm:$0xf]
          %v1466 = vld [vmem:[#allocation4 + $0x30] sm:$0xf]
          %v1467 = vld [vmem:[#allocation4 + $0x34] sm:$0xf]
          %v1468 = vld [vmem:[#allocation4 + $0x38] sm:$0xf]
          %v1469 = vld [vmem:[#allocation4 + $0x3c] sm:$0xf]
          %v1470 = vld [vmem:[#allocation4 + $0x40] sm:$0xf]
          %v1471 = vld [vmem:[#allocation4 + $0x44] sm:$0xf]
          %v1472 = vld [vmem:[#allocation4 + $0x48] sm:$0xf]
          %v1473 = vld [vmem:[#allocation4 + $0x4c] sm:$0xf]
          %v1474 = vld [vmem:[#allocation4 + $0x50] sm:$0xf]
          %v1475 = vld [vmem:[#allocation4 + $0x54] sm:$0xf]
          %v1476 = vld [vmem:[#allocation4 + $0x58] sm:$0xf]
          %v1477 = vld [vmem:[#allocation4 + $0x5c] sm:$0xf]
          %v1478 = vld [vmem:[#allocation4 + $0x60] sm:$0xf]
          %v1479 = vld [vmem:[#allocation4 + $0x64] sm:$0xf]
          %v1480 = vld [vmem:[#allocation4 + $0x68] sm:$0xf]
          %v1481 = vld [vmem:[#allocation4 + $0x6c] sm:$0xf]
          %v1482 = vld [vmem:[#allocation4 + $0x70] sm:$0xf]
          %v1483 = vld [vmem:[#allocation4 + $0x74] sm:$0xf]
          %v1484 = vld [vmem:[#allocation4 + $0x78] sm:$0xf]
          %v1485 = vld [vmem:[#allocation4 + $0x7c] sm:$0xf]
          %v1518 = vunpack.c.l.b16 %v1454
          %v1519 = vunpack.c.l.b16 %v1455
          %v1520 = vunpack.c.l.b16 %v1456
          %v1521 = vunpack.c.l.b16 %v1457
          %v1522 = vunpack.c.l.b16 %v1458
          %v1523 = vunpack.c.l.b16 %v1459
          %v1524 = vunpack.c.l.b16 %v1460
          %v1525 = vunpack.c.l.b16 %v1461
          %v1526 = vunpack.c.l.b16 %v1462
          %v1527 = vunpack.c.l.b16 %v1463
          %v1528 = vunpack.c.l.b16 %v1464
          %v1529 = vunpack.c.l.b16 %v1465
          %v1530 = vunpack.c.l.b16 %v1466
          %v1531 = vunpack.c.l.b16 %v1467
          %v1532 = vunpack.c.l.b16 %v1468
          %v1533 = vunpack.c.l.b16 %v1469
          %v1534 = vunpack.c.l.b16 %v1470
          %v1535 = vunpack.c.l.b16 %v1471
          %v1536 = vunpack.c.l.b16 %v1472
          %v1537 = vunpack.c.l.b16 %v1473
          %v1538 = vunpack.c.l.b16 %v1474
          %v1539 = vunpack.c.l.b16 %v1475
          %v1540 = vunpack.c.l.b16 %v1476
          %v1541 = vunpack.c.l.b16 %v1477
          %v1542 = vunpack.c.l.b16 %v1478
          %v1543 = vunpack.c.l.b16 %v1479
          %v1544 = vunpack.c.l.b16 %v1480
          %v1545 = vunpack.c.l.b16 %v1481
          %v1546 = vunpack.c.l.b16 %v1482
          %v1547 = vunpack.c.l.b16 %v1483
          %v1548 = vunpack.c.l.b16 %v1484
          %v1549 = vunpack.c.l.b16 %v1485
          %v1550 = vpack.c.b16 %v1519, %v1518
          %v1551 = vpack.c.b16 %v1521, %v1520
          %v1552 = vpack.c.b16 %v1523, %v1522
          %v1553 = vpack.c.b16 %v1525, %v1524
          %v1554 = vpack.c.b16 %v1527, %v1526
          %v1555 = vpack.c.b16 %v1529, %v1528
          %v1556 = vpack.c.b16 %v1531, %v1530
          %v1557 = vpack.c.b16 %v1533, %v1532
          %v1558 = vpack.c.b16 %v1535, %v1534
          %v1559 = vpack.c.b16 %v1537, %v1536
          %v1560 = vpack.c.b16 %v1539, %v1538
          %v1561 = vpack.c.b16 %v1541, %v1540
          %v1562 = vpack.c.b16 %v1543, %v1542
          %v1563 = vpack.c.b16 %v1545, %v1544
          %v1564 = vpack.c.b16 %v1547, %v1546
          %v1565 = vpack.c.b16 %v1549, %v1548
          %1582 = vmatprep.subr.bf16.mxu0 0
          %1583 = vmatpush1.bf16.msra.mxu0 %v1550
          %1584 = vmatprep.subr.bf16.mxu0 0
          %1585 = vmatpush1.bf16.msra.mxu0 %v1551
          %1586 = vmatprep.subr.bf16.mxu0 0
          %1587 = vmatpush1.bf16.msra.mxu0 %v1552
          %1588 = vmatprep.subr.bf16.mxu0 0
          %1589 = vmatpush1.bf16.msra.mxu0 %v1553
          %1590 = vmatprep.subr.bf16.mxu0 0
          %1591 = vmatpush1.bf16.msra.mxu0 %v1554
          %1592 = vmatprep.subr.bf16.mxu0 0
          %1593 = vmatpush1.bf16.msra.mxu0 %v1555
          %1594 = vmatprep.subr.bf16.mxu0 0
          %1595 = vmatpush1.bf16.msra.mxu0 %v1556
          %1596 = vmatprep.subr.bf16.mxu0 0
          %1597 = vmatpush1.bf16.msra.mxu0 %v1557
          %1598 = vmatprep.subr.bf16.mxu0 0
          %1599 = vmatpush1.bf16.msra.mxu0 %v1558
          %1600 = vmatprep.subr.bf16.mxu0 0
          %1601 = vmatpush1.bf16.msra.mxu0 %v1559
          %1602 = vmatprep.subr.bf16.mxu0 0
          %1603 = vmatpush1.bf16.msra.mxu0 %v1560
          %1604 = vmatprep.subr.bf16.mxu0 0
          %1605 = vmatpush1.bf16.msra.mxu0 %v1561
          %1606 = vmatprep.subr.bf16.mxu0 0
          %1607 = vmatpush1.bf16.msra.mxu0 %v1562
          %1608 = vmatprep.subr.bf16.mxu0 0
          %1609 = vmatpush1.bf16.msra.mxu0 %v1563
          %1610 = vmatprep.subr.bf16.mxu0 0
          %1611 = vmatpush1.bf16.msra.mxu0 %v1564
          %1612 = vmatprep.subr.bf16.mxu0 0
          %1613 = vmatpush1.bf16.msra.mxu0 %v1565
          %1614 = vmatprep.mubr.bf16.mxu0 %v1453
          %1615 = vmatmul.mubr.bf16.gmra.mrb[0].mxu0 %v1452
          %v1616 = vpop.f32.mrb[0].mxu0
          %v1617 = vadd.f32 0.0, %v1616
          %v1618 = vpop.f32.mrb[0].mxu0
          %v1619 = vpop.f32.mrb[0].mxu0
          %v1620 = vpop.f32.mrb[0].mxu0
          %1621 = vdwg.mxu0
          %v1622 = vld [vmem:[#allocation3] sm:$0x1]
          %v1623 = vmul.f32 %v1622, 0.125
          %v1624 = vld [vmem:[#allocation3 + $0x1] sm:$0x1]
          %v1625 = vmul.f32 %v1624, 0.125
          %v1626 = vmul.f32 %v1623, %v1623
          %v1627 = vsub.f32 %v1625, %v1626
          %v1628 = vmax.f32 %v1627, 0.0
          %v1629 = vld [vmem:[%s5 + $0x2] ss:$0 sm:$0xff]
          %v1630 = vadd.f32 %v1628, 1e-05
          %v1631 = vrsqrt.pop %v1630
          %v1632 = vmul.f32 %v1629, %v1631
          %v1633 = vld [vmem:[%s5 + $0x3] ss:$0 sm:$0xff]
          %v1634 = vmul.f32 %v1623, %v1632
          %v1635 = vsub.f32 %v1633, %v1634
          %v1636 = vlaneseq
          %v1637 = vshrl.u32 %v1636, 7
          %v1638 = vsub.s32 0, %v1637
          %v1639 = vrot.slane %v1632, %v1638
          %v1640 = vmul.f32 %v1617, %v1639
          %v1641 = vlaneseq
          %v1642 = vshrl.u32 %v1641, 7
          %v1643 = vsub.s32 0, %v1642
          %v1644 = vrot.slane %v1635, %v1643
          %v1645 = vadd.f32 %v1640, %v1644
          %v1646 = vmax.f32 %v1645, 0.0
          %v1647 = vpack.c.bf16 %v1646, %v1646
          %v1648 = vld [vmem:[#allocation7] sm:$0xf]
          %v1649 = vld [vmem:[#allocation7 + $0x4] sm:$0xf]
          %v1650 = vld [vmem:[#allocation7 + $0x8] sm:$0xf]
          %v1651 = vld [vmem:[#allocation7 + $0xc] sm:$0xf]
          %v1652 = vld [vmem:[#allocation7 + $0x10] sm:$0xf]
          %v1653 = vld [vmem:[#allocation7 + $0x14] sm:$0xf]
          %v1654 = vld [vmem:[#allocation7 + $0x18] sm:$0xf]
          %v1655 = vld [vmem:[#allocation7 + $0x1c] sm:$0xf]
          %v1656 = vld [vmem:[#allocation7 + $0x20] sm:$0xf]
          %v1657 = vld [vmem:[#allocation7 + $0x24] sm:$0xf]
          %v1658 = vld [vmem:[#allocation7 + $0x28] sm:$0xf]
          %v1659 = vld [vmem:[#allocation7 + $0x2c] sm:$0xf]
          %v1660 = vld [vmem:[#allocation7 + $0x30] sm:$0xf]
          %v1661 = vld [vmem:[#allocation7 + $0x34] sm:$0xf]
          %v1662 = vld [vmem:[#allocation7 + $0x38] sm:$0xf]
          %v1663 = vld [vmem:[#allocation7 + $0x3c] sm:$0xf]
          %v1664 = vld [vmem:[%s5 + $0x4] ss:$0 sm:$0xff]
          %v1681 = vunpack.c.l.b16 %v1648
          %v1682 = vunpack.c.l.b16 %v1649
          %v1683 = vunpack.c.l.b16 %v1650
          %v1684 = vunpack.c.l.b16 %v1651
          %v1685 = vunpack.c.l.b16 %v1652
          %v1686 = vunpack.c.l.b16 %v1653
          %v1687 = vunpack.c.l.b16 %v1654
          %v1688 = vunpack.c.l.b16 %v1655
          %v1689 = vunpack.c.l.b16 %v1656
          %v1690 = vunpack.c.l.b16 %v1657
          %v1691 = vunpack.c.l.b16 %v1658
          %v1692 = vunpack.c.l.b16 %v1659
          %v1693 = vunpack.c.l.b16 %v1660
          %v1694 = vunpack.c.l.b16 %v1661
          %v1695 = vunpack.c.l.b16 %v1662
          %v1696 = vunpack.c.l.b16 %v1663
          %v1697 = vpack.c.b16 %v1682, %v1681
          %v1698 = vpack.c.b16 %v1684, %v1683
          %v1699 = vpack.c.b16 %v1686, %v1685
          %v1700 = vpack.c.b16 %v1688, %v1687
          %v1701 = vpack.c.b16 %v1690, %v1689
          %v1702 = vpack.c.b16 %v1692, %v1691
          %v1703 = vpack.c.b16 %v1694, %v1693
          %v1704 = vpack.c.b16 %v1696, %v1695
          %1713 = vmatprep.subr.bf16.mxu0 0
          %1714 = vmatpush1.bf16.msra.mxu0 %v1697
          %1715 = vmatprep.subr.bf16.mxu0 0
          %1716 = vmatpush1.bf16.msra.mxu0 %v1698
          %1717 = vmatprep.subr.bf16.mxu0 0
          %1718 = vmatpush1.bf16.msra.mxu0 %v1699
          %1719 = vmatprep.subr.bf16.mxu0 0
          %1720 = vmatpush1.bf16.msra.mxu0 %v1700
          %1721 = vmatprep.subr.bf16.mxu0 0
          %1722 = vmatpush1.bf16.msra.mxu0 %v1701
          %1723 = vmatprep.subr.bf16.mxu0 0
          %1724 = vmatpush1.bf16.msra.mxu0 %v1702
          %1725 = vmatprep.subr.bf16.mxu0 0
          %1726 = vmatpush1.bf16.msra.mxu0 %v1703
          %1727 = vmatprep.subr.bf16.mxu0 0
          %1728 = vmatpush1.bf16.msra.mxu0 %v1704
          %1729 = vmatprep.subr.bf16.mxu0 0
          %1730 = vmatpush1.bf16.msra.mxu0 0
          %1731 = vmatprep.subr.bf16.mxu0 0
          %1732 = vmatpush1.bf16.msra.mxu0 0
          %1733 = vmatprep.subr.bf16.mxu0 0
          %1734 = vmatpush1.bf16.msra.mxu0 0
          %1735 = vmatprep.subr.bf16.mxu0 0
          %1736 = vmatpush1.bf16.msra.mxu0 0
          %1737 = vmatprep.subr.bf16.mxu0 0
          %1738 = vmatpush1.bf16.msra.mxu0 0
          %1739 = vmatprep.subr.bf16.mxu0 0
          %1740 = vmatpush1.bf16.msra.mxu0 0
          %1741 = vmatprep.subr.bf16.mxu0 0
          %1742 = vmatpush1.bf16.msra.mxu0 0
          %1743 = vmatprep.subr.bf16.mxu0 0
          %1744 = vmatpush1.bf16.msra.mxu0 0
          %1745 = vmatprep.mubr.bf16.mxu0 0
          %1746 = vmatmul.mubr.bf16.gmra.mrb[0].mxu0 %v1647
          %v1747 = vpop.f32.mrb[0].mxu0
          %v1748 = vadd.f32 %v1664, %v1747
          %v1749 = vpop.f32.mrb[0].mxu0
          %v1750 = vpop.f32.mrb[0].mxu0
          %v1751 = vpop.f32.mrb[0].mxu0
          %1752 = vdwg.mxu0
          %v1753 = vmax.f32 %v1748, 0.0
          %v1754 = vpack.c.bf16 %v1753, %v1753
          %v1755 = vld [vmem:[#allocation9] sm:$0xf]
          %v1756 = vld [vmem:[#allocation9 + $0x4] sm:$0xf]
          %v1757 = vld [vmem:[#allocation9 + $0x8] sm:$0xf]
          %v1758 = vld [vmem:[#allocation9 + $0xc] sm:$0xf]
          %v1759 = vld [vmem:[#allocation9 + $0x10] sm:$0xf]
          %v1760 = vld [vmem:[#allocation9 + $0x14] sm:$0xf]
          %v1761 = vld [vmem:[#allocation9 + $0x18] sm:$0xf]
          %v1762 = vld [vmem:[#allocation9 + $0x1c] sm:$0xf]
          %v1763 = vld [vmem:[#allocation9 + $0x20] sm:$0xf]
          %v1764 = vld [vmem:[#allocation9 + $0x24] sm:$0xf]
          %v1765 = vld [vmem:[#allocation9 + $0x28] sm:$0xf]
          %v1766 = vld [vmem:[#allocation9 + $0x2c] sm:$0xf]
          %v1767 = vld [vmem:[#allocation9 + $0x30] sm:$0xf]
          %v1768 = vld [vmem:[#allocation9 + $0x34] sm:$0xf]
          %v1769 = vld [vmem:[#allocation9 + $0x38] sm:$0xf]
          %v1770 = vld [vmem:[#allocation9 + $0x3c] sm:$0xf]
          %v1771 = vld [vmem:[%s5 + $0x5] ss:$0 sm:$0xff]
          %v1788 = vunpack.c.l.b16 %v1755
          %v1789 = vunpack.c.l.b16 %v1756
          %v1790 = vunpack.c.l.b16 %v1757
          %v1791 = vunpack.c.l.b16 %v1758
          %v1792 = vunpack.c.l.b16 %v1759
          %v1793 = vunpack.c.l.b16 %v1760
          %v1794 = vunpack.c.l.b16 %v1761
          %v1795 = vunpack.c.l.b16 %v1762
          %v1796 = vunpack.c.l.b16 %v1763
          %v1797 = vunpack.c.l.b16 %v1764
          %v1798 = vunpack.c.l.b16 %v1765
          %v1799 = vunpack.c.l.b16 %v1766
          %v1800 = vunpack.c.l.b16 %v1767
          %v1801 = vunpack.c.l.b16 %v1768
          %v1802 = vunpack.c.l.b16 %v1769
          %v1803 = vunpack.c.l.b16 %v1770
          %v1804 = vpack.c.b16 %v1789, %v1788
          %v1805 = vpack.c.b16 %v1791, %v1790
          %v1806 = vpack.c.b16 %v1793, %v1792
          %v1807 = vpack.c.b16 %v1795, %v1794
          %v1808 = vpack.c.b16 %v1797, %v1796
          %v1809 = vpack.c.b16 %v1799, %v1798
          %v1810 = vpack.c.b16 %v1801, %v1800
          %v1811 = vpack.c.b16 %v1803, %v1802
          %1820 = vmatprep.subr.bf16.mxu0 0
          %1821 = vmatpush1.bf16.msra.mxu0 %v1804
          %1822 = vmatprep.subr.bf16.mxu0 0
          %1823 = vmatpush1.bf16.msra.mxu0 %v1805
          %1824 = vmatprep.subr.bf16.mxu0 0
          %1825 = vmatpush1.bf16.msra.mxu0 %v1806
          %1826 = vmatprep.subr.bf16.mxu0 0
          %1827 = vmatpush1.bf16.msra.mxu0 %v1807
          %1828 = vmatprep.subr.bf16.mxu0 0
          %1829 = vmatpush1.bf16.msra.mxu0 %v1808
          %1830 = vmatprep.subr.bf16.mxu0 0
          %1831 = vmatpush1.bf16.msra.mxu0 %v1809
          %1832 = vmatprep.subr.bf16.mxu0 0
          %1833 = vmatpush1.bf16.msra.mxu0 %v1810
          %1834 = vmatprep.subr.bf16.mxu0 0
          %1835 = vmatpush1.bf16.msra.mxu0 %v1811
          %1836 = vmatprep.subr.bf16.mxu0 0
          %1837 = vmatpush1.bf16.msra.mxu0 0
          %1838 = vmatprep.subr.bf16.mxu0 0
          %1839 = vmatpush1.bf16.msra.mxu0 0
          %1840 = vmatprep.subr.bf16.mxu0 0
          %1841 = vmatpush1.bf16.msra.mxu0 0
          %1842 = vmatprep.subr.bf16.mxu0 0
          %1843 = vmatpush1.bf16.msra.mxu0 0
          %1844 = vmatprep.subr.bf16.mxu0 0
          %1845 = vmatpush1.bf16.msra.mxu0 0
          %1846 = vmatprep.subr.bf16.mxu0 0
          %1847 = vmatpush1.bf16.msra.mxu0 0
          %1848 = vmatprep.subr.bf16.mxu0 0
          %1849 = vmatpush1.bf16.msra.mxu0 0
          %1850 = vmatprep.subr.bf16.mxu0 0
          %1851 = vmatpush1.bf16.msra.mxu0 0
          %1852 = vmatprep.mubr.bf16.mxu0 0
          %1853 = vmatmul.mubr.bf16.gmra.mrb[0].mxu0 %v1754
          %v1854 = vpop.f32.mrb[0].mxu0
          %v1855 = vadd.f32 %v1771, %v1854
          %v1856 = vpop.f32.mrb[0].mxu0
          %v1857 = vpop.f32.mrb[0].mxu0
          %v1858 = vpop.f32.mrb[0].mxu0
          %1859 = vdwg.mxu0
          %1860 = vst [vmem:[%s304] sm:$0xff] %v1855
        $region72: #{mlp_forward.1} parent=43 // pred_fallthru
          _
        %s1861 = sand.u32 %s177, 1
        %s1862 = scalar_lea.sflag [#allocation6], %s1861
        %s1863 = sand.u32 %s177, 1
        %s1864 = smul.addr %s1863, 8
        %s1865 = scalar_lea.vmem [#allocation10], %s1864
        // Predicated region
        $region73: #{mlp_forward.1} parent=43 // pred_check
          %p1866 = pneg %p187
        $region74: #{mlp_forward.1} parent=43 // pred_check_branch
          %1868 = sbr.rel (%p1866) target = $region76
        $region75: #{mlp_forward.1} parent=43 // pred_region
          %p1869 = scmp.eq.s32.totalorder %s26, 2
          %s1870 = scalar_select %p1869, %s27, 0
          %s1872 = ssub.s32 128, 128
          %1873 = vsyncadd %s1862, %s1872
          %s1874 = smul.addr %s1870, 128
          %s1875 = scalar_lea.hbm %s6, %s1874
          %s1877 = sshll.u32 %s1865, 4
          %s1878 = int_to_ptr.vmem [resolvable:$true] %s1877
          %1880 = dma.vmem_to_hbm [thread:$0]  %s1878, 128, %s1875, %s1862
        $region76: #{mlp_forward.1} parent=43 // pred_fallthru
          _
      $region44: #{mlp_forward.1} parent=5 // pred_fallthru
        _
      %p1881 = scmp.le.s32.totalorder 2, %s17
      // Predicated region
      $region77: #{mlp_forward.1} parent=5 // pred_check
        %p1882 = pneg %p1881
      $region78: #{mlp_forward.1} parent=5 // pred_check_branch
        %1884 = sbr.rel (%p1882) target = $region80
      $region79: #{mlp_forward.1} parent=5 // pred_region
        %s1885 = ssub.s32 %s17, 2
        // Predicated region
        $region81: #{mlp_forward.1} parent=79 // pred_check
          %p1886 = pneg %p193
        $region82: #{mlp_forward.1} parent=79 // pred_check_branch
          %1888 = sbr.rel (%p1886) target = $region84
        $region83: #{mlp_forward.1} parent=79 // pred_region
          %s1889 = sand.u32 %s178, 1
          %s1890 = scalar_lea.sflag [#allocation6], %s1889
          %s1891 = sand.u32 %s178, 1
          %s1892 = smul.addr %s1891, 8
          %s1893 = scalar_lea.vmem [#allocation10], %s1892
          %1894 = dma.done %s1890, 128
        $region84: #{mlp_forward.1} parent=79 // pred_fallthru
          _
      $region80: #{mlp_forward.1} parent=5 // pred_fallthru
        _
    $region6: #{mlp_forward.1} parent=1 // loop_footer
      %s21 = sadd.s32 1, %s17
    $region7: #{mlp_forward.1} parent=1 // loop_footer_branch
      %16 = sbr.rel target = $region3
    $region8: #{mlp_forward.1} parent=1 // loop_exit
      _
    %1895 = vsyncpa [#allocation5], 1
    %s1896 = scalar_lea.sflag [#allocation5], 1
    %1897 = vsyncpa %s1896, 1
    %1898 = vsyncpa [#allocation8], 1
    %1899 = vsyncpa [#allocation6], 1
    %s1900 = scalar_lea.sflag [#allocation6], 1
    %1901 = vsyncpa %s1900, 1

</llo_original>
